<compile_context>
chip_gen: v6e
topology: v6e:2x2x1
jax: 0.10.0
libtpu: 0.0.40
codegen_flags: <defaults>
</compile_context>

<pallas_src>
import functools

import numpy as np
import jax
import jax.numpy as jnp
from jax import lax
from jax.experimental import pallas as pl
from jax.experimental.pallas import tpu as pltpu


def _attention_kernel(q_ref, k_ref, v_ref, wq_ref, wk_ref, wv_ref, z_ref,
                      *, n_head, d_k, d_v, mxu_dtype):
    # q_ref           : (1, block_q, d_model)  q tile for one batch element
    # k_ref / v_ref   : (1, len_k, d_model)    full K/V for that batch element
    # wq_ref / wk_ref : (d_model, n_head*d_k)  head-stacked weights (wq pre-scaled)
    # wv_ref          : (d_model, n_head*d_v)
    # z_ref           : (1, block_q, n_head*d_v)  lane-dense output block
    q = q_ref[0]
    k = k_ref[0]
    v = v_ref[0]

    # Head-stacked projections: one lane-dense MXU matmul each.
    qh = jnp.dot(q, wq_ref[...], preferred_element_type=jnp.float32)  # (bq, H*dk)
    kh = jnp.dot(k, wk_ref[...], preferred_element_type=jnp.float32)  # (lk, H*dk)
    vh = jnp.dot(v, wv_ref[...], preferred_element_type=jnp.float32)  # (lk, H*dv)

    if mxu_dtype is not None:
        # bf16 operands for the attention matmuls (f32 accumulation kept below).
        qh = qh.astype(mxu_dtype)
        kh = kh.astype(mxu_dtype)
        vh = vh.astype(mxu_dtype)

    # Per-head attention (static unroll over heads; n_head is small).
    # Head h occupies lane columns [h*d_k, (h+1)*d_k) of qh/kh and
    # [h*d_v, (h+1)*d_v) of vh.
    z_heads = []
    for h in range(n_head):
        qh_h = qh[:, h * d_k:(h + 1) * d_k]        # (bq, dk)
        kh_h = kh[:, h * d_k:(h + 1) * d_k]        # (lk, dk)
        vh_h = vh[:, h * d_v:(h + 1) * d_v]        # (lk, dv)

        # scores[q, k] = sum_d qh_h[q, d] * kh_h[k, d]   (no explicit transpose)
        scores = lax.dot_general(
            qh_h, kh_h,
            dimension_numbers=(((1,), (1,)), ((), ())),
            preferred_element_type=jnp.float32)    # (bq, lk)

        m = jnp.max(scores, axis=-1, keepdims=True)
        p = jnp.exp(scores - m)
        denom = jnp.sum(p, axis=-1, keepdims=True)
        attn = p * pl.reciprocal(denom, approx=True)   # row-wise softmax

        if mxu_dtype is not None:
            attn = attn.astype(mxu_dtype)

        z_heads.append(jnp.dot(attn, vh_h, preferred_element_type=jnp.float32))

    # Lane-dense result row layout: [head0 d_v | head1 d_v | ...].
    z = jnp.concatenate(z_heads, axis=-1)          # (bq, H*dv)
    z_ref[0] = z.astype(z_ref.dtype)


def attention_forward(q, k, v, wq, wk, wv, *, n_head, d_k, d_v,
                      block_q=512, mxu_dtype=None):
    """q,k,v: (b, seq, d_model). wq/wk: (n_head*d_k, d_model), wv: (n_head*d_v, d_model)
    (PyTorch nn.Linear weight layout). Returns z: (b, n_head, len_q, d_v)."""
    b, len_q, d_model = q.shape
    len_k = k.shape[1]
    len_v = v.shape[1]
    assert len_k == len_v

    # PyTorch nn.Linear: x @ W.T.  W.T already has head-major stacked columns,
    # i.e. column index = h*d_k + j, matching the .view(..., n_head, d_k) split.
    inv_temp = float(1.0 / np.sqrt(d_k))
    wq_s = (wq * inv_temp).T.astype(wq.dtype)      # fold 1/temperature once
    wk_s = wk.T
    wv_s = wv.T

    block_q = min(block_q, len_q)
    grid = (b, pl.cdiv(len_q, block_q))

    kernel = functools.partial(_attention_kernel, n_head=n_head, d_k=d_k,
                               d_v=d_v, mxu_dtype=mxu_dtype)

    # VMEM budget: double-buffered I/O blocks + in-kernel f32 temporaries, 2x headroom.
    itemsize = 4
    io_bytes = 2 * itemsize * (
        block_q * d_model + 2 * len_k * d_model
        + 2 * d_model * n_head * d_k + d_model * n_head * d_v
        + block_q * n_head * d_v)
    tmp_bytes = 4 * itemsize * (block_q * len_k
                                + block_q * n_head * d_k + 2 * len_k * n_head * d_k)
    vmem_limit = int(min(64 * 2**20, max(32 * 2**20, 2 * (io_bytes + tmp_bytes))))

    z_dense = pl.pallas_call(
        kernel,
        out_shape=jax.ShapeDtypeStruct((b, len_q, n_head * d_v), jnp.float32),
        grid_spec=pltpu.PrefetchScalarGridSpec(
            num_scalar_prefetch=0,
            grid=grid,
            in_specs=[
                pl.BlockSpec((1, block_q, d_model), lambda bi, qi: (bi, qi, 0)),
                pl.BlockSpec((1, len_k, d_model), lambda bi, qi: (bi, 0, 0)),
                pl.BlockSpec((1, len_v, d_model), lambda bi, qi: (bi, 0, 0)),
                pl.BlockSpec((d_model, n_head * d_k), lambda bi, qi: (0, 0)),
                pl.BlockSpec((d_model, n_head * d_k), lambda bi, qi: (0, 0)),
                pl.BlockSpec((d_model, n_head * d_v), lambda bi, qi: (0, 0)),
            ],
            out_specs=pl.BlockSpec((1, block_q, n_head * d_v),
                                   lambda bi, qi: (bi, qi, 0)),
        ),
        compiler_params=pltpu.CompilerParams(
            dimension_semantics=("parallel", "parallel"),
            vmem_limit_bytes=vmem_limit),
    )(q, k, v, wq_s, wk_s, wv_s)

    # (b, len_q, H*dv) -> (b, H, len_q, dv)  (matches the PyTorch forward return).
    return z_dense.reshape(b, len_q, n_head, d_v).transpose(0, 2, 1, 3)


def attention_reference(q, k, v, wq, wk, wv, *, n_head, d_k, d_v):
    """Plain-JAX reference mirroring the PyTorch forward (eval mode, no mask)."""
    b, len_q, d_model = q.shape
    len_k = k.shape[1]
    qp = (q @ wq.T).reshape(b, len_q, n_head, d_k).transpose(0, 2, 1, 3)
    kp = (k @ wk.T).reshape(b, len_k, n_head, d_k).transpose(0, 2, 1, 3)
    vp = (v @ wv.T).reshape(b, len_k, n_head, d_v).transpose(0, 2, 1, 3)
    attn = jnp.einsum("bhqd,bhkd->bhqk", qp / np.sqrt(d_k), kp)
    attn = jax.nn.softmax(attn, axis=-1)
    return jnp.einsum("bhqk,bhkd->bhqd", attn, vp)


if __name__ == "__main__":
    # Small shapes consistent with Attention(d_model, d_k, d_v, n_head).
    # n_head*d_v = 128 so the kernel's output block is exactly lane-dense.
    batch, seq, d_model = 2, 16, 64
    d_k, d_v, n_head = 32, 32, 4

    key = jax.random.PRNGKey(0)
    kq, kk, kv, kwq, kwk, kwv = jax.random.split(key, 6)

    q = jax.random.normal(kq, (batch, seq, d_model), dtype=jnp.float32)
    k = jax.random.normal(kk, (batch, seq, d_model), dtype=jnp.float32)
    v = jax.random.normal(kv, (batch, seq, d_model), dtype=jnp.float32)

    # Deterministic parameter init (PyTorch nn.Linear weight layout: (out, in)).
    bound = 1.0 / np.sqrt(d_model)
    wq = jax.random.uniform(kwq, (n_head * d_k, d_model), jnp.float32, -bound, bound)
    wk = jax.random.uniform(kwk, (n_head * d_k, d_model), jnp.float32, -bound, bound)
    wv = jax.random.uniform(kwv, (n_head * d_v, d_model), jnp.float32, -bound, bound)

    z_ref = attention_reference(q, k, v, wq, wk, wv, n_head=n_head, d_k=d_k, d_v=d_v)

    # f32 MXU operands (default).
    z = attention_forward(q, k, v, wq, wk, wv, n_head=n_head, d_k=d_k, d_v=d_v)
    z = jax.block_until_ready(z)
    np.testing.assert_allclose(np.asarray(z), np.asarray(z_ref), rtol=1e-2, atol=1e-2)

    # bf16 MXU operands for the attention matmuls (v6e/v7x fast path), f32 accumulate.
    z_bf16 = attention_forward(q, k, v, wq, wk, wv, n_head=n_head, d_k=d_k, d_v=d_v,
                               mxu_dtype=jnp.bfloat16)
    z_bf16 = jax.block_until_ready(z_bf16)
    np.testing.assert_allclose(np.asarray(z_bf16), np.asarray(z_ref),
                               rtol=3e-2, atol=3e-2)

    print("KERNEL_OK")
</pallas_src>

<mosaic_0001>
module attributes {stable_mosaic.version = 11 : i64} {
  func.func @_attention_kernel(%arg0: i32, %arg1: i32, %arg2: memref<1x16x64xf32, #tpu.memory_space<vmem>>, %arg3: memref<1x16x64xf32, #tpu.memory_space<vmem>>, %arg4: memref<1x16x64xf32, #tpu.memory_space<vmem>>, %arg5: memref<64x128xf32, #tpu.memory_space<vmem>>, %arg6: memref<64x128xf32, #tpu.memory_space<vmem>>, %arg7: memref<64x128xf32, #tpu.memory_space<vmem>>, %arg8: memref<1x16x128xf32, #tpu.memory_space<vmem>>) attributes {dimension_semantics = [#tpu.dimension_semantics<parallel>, #tpu.dimension_semantics<parallel>], iteration_bounds = array<i64: 2, 1>, scalar_prefetch = 0 : i64, scratch_operands = 0 : i64, tpu.core_type = #tpu.core_type<tc>, window_params = [{transform_indices = @transform_0, window_bounds = array<i64: 1, 16, 64>}, {transform_indices = @transform_1, window_bounds = array<i64: 1, 16, 64>}, {transform_indices = @transform_2, window_bounds = array<i64: 1, 16, 64>}, {pipeline_mode = #tpu.pipeline_mode<synchronous>, transform_indices = @transform_3, window_bounds = array<i64: 64, 128>}, {pipeline_mode = #tpu.pipeline_mode<synchronous>, transform_indices = @transform_4, window_bounds = array<i64: 64, 128>}, {pipeline_mode = #tpu.pipeline_mode<synchronous>, transform_indices = @transform_5, window_bounds = array<i64: 64, 128>}, {transform_indices = @transform_6, window_bounds = array<i64: 1, 16, 128>}]} {
    %c0 = arith.constant 0 : index
    %c0_0 = arith.constant 0 : index
    %c0_1 = arith.constant 0 : index
    %0 = vector.load %arg2[%c0, %c0_0, %c0_1] : memref<1x16x64xf32, #tpu.memory_space<vmem>>, vector<1x16x64xf32>
    %1 = vector.shape_cast %0 : vector<1x16x64xf32> to vector<16x64xf32>
    %c0_2 = arith.constant 0 : index
    %c0_3 = arith.constant 0 : index
    %c0_4 = arith.constant 0 : index
    %2 = vector.load %arg3[%c0_2, %c0_3, %c0_4] : memref<1x16x64xf32, #tpu.memory_space<vmem>>, vector<1x16x64xf32>
    %3 = vector.shape_cast %2 : vector<1x16x64xf32> to vector<16x64xf32>
    %c0_5 = arith.constant 0 : index
    %c0_6 = arith.constant 0 : index
    %c0_7 = arith.constant 0 : index
    %4 = vector.load %arg4[%c0_5, %c0_6, %c0_7] : memref<1x16x64xf32, #tpu.memory_space<vmem>>, vector<1x16x64xf32>
    %5 = vector.shape_cast %4 : vector<1x16x64xf32> to vector<16x64xf32>
    %c0_8 = arith.constant 0 : index
    %c0_9 = arith.constant 0 : index
    %6 = vector.load %arg5[%c0_8, %c0_9] : memref<64x128xf32, #tpu.memory_space<vmem>>, vector<64x128xf32>
    %cst = arith.constant dense<0.000000e+00> : vector<16x128xf32>
    %7 = tpu.matmul %1, %6, %cst {dimension_numbers = #tpu.dot_dimension_numbers<[1], [0], [0], [1], [0, 0, 1, 1], [], []>} : vector<16x64xf32>, vector<64x128xf32>, vector<16x128xf32> -> vector<16x128xf32>
    %c0_10 = arith.constant 0 : index
    %c0_11 = arith.constant 0 : index
    %8 = vector.load %arg6[%c0_10, %c0_11] : memref<64x128xf32, #tpu.memory_space<vmem>>, vector<64x128xf32>
    %cst_12 = arith.constant dense<0.000000e+00> : vector<16x128xf32>
    %9 = tpu.matmul %3, %8, %cst_12 {dimension_numbers = #tpu.dot_dimension_numbers<[1], [0], [0], [1], [0, 0, 1, 1], [], []>} : vector<16x64xf32>, vector<64x128xf32>, vector<16x128xf32> -> vector<16x128xf32>
    %c0_13 = arith.constant 0 : index
    %c0_14 = arith.constant 0 : index
    %10 = vector.load %arg7[%c0_13, %c0_14] : memref<64x128xf32, #tpu.memory_space<vmem>>, vector<64x128xf32>
    %cst_15 = arith.constant dense<0.000000e+00> : vector<16x128xf32>
    %11 = tpu.matmul %5, %10, %cst_15 {dimension_numbers = #tpu.dot_dimension_numbers<[1], [0], [0], [1], [0, 0, 1, 1], [], []>} : vector<16x64xf32>, vector<64x128xf32>, vector<16x128xf32> -> vector<16x128xf32>
    %12 = vector.extract_strided_slice %7 {offsets = [0, 0], sizes = [16, 32], strides = [1, 1]} : vector<16x128xf32> to vector<16x32xf32>
    %13 = vector.extract_strided_slice %9 {offsets = [0, 0], sizes = [16, 32], strides = [1, 1]} : vector<16x128xf32> to vector<16x32xf32>
    %14 = vector.extract_strided_slice %11 {offsets = [0, 0], sizes = [16, 32], strides = [1, 1]} : vector<16x128xf32> to vector<16x32xf32>
    %cst_16 = arith.constant dense<0.000000e+00> : vector<16x16xf32>
    %15 = tpu.matmul %12, %13, %cst_16 {dimension_numbers = #tpu.dot_dimension_numbers<[1], [1], [0], [0], [0, 0, 1, 0], [], []>} : vector<16x32xf32>, vector<16x32xf32>, vector<16x16xf32> -> vector<16x16xf32>
    %cst_17 = arith.constant dense<0xFF800000> : vector<16xf32>
    %16 = vector.multi_reduction <maximumf>, %15, %cst_17 [1] : vector<16x16xf32> to vector<16xf32>
    %17 = vector.shape_cast %16 : vector<16xf32> to vector<16x1xf32>
    %18 = vector.broadcast %17 : vector<16x1xf32> to vector<16x16xf32>
    %19 = arith.subf %15, %18 : vector<16x16xf32>
    %20 = math.exp %19 : vector<16x16xf32>
    %cst_18 = arith.constant dense<0.000000e+00> : vector<16xf32>
    %21 = vector.multi_reduction <add>, %20, %cst_18 [1] : vector<16x16xf32> to vector<16xf32>
    %22 = vector.shape_cast %21 : vector<16xf32> to vector<16x1xf32>
    %23 = tpu.reciprocal %22 {approx = true} : vector<16x1xf32> -> vector<16x1xf32>
    %24 = vector.broadcast %23 : vector<16x1xf32> to vector<16x16xf32>
    %25 = arith.mulf %20, %24 : vector<16x16xf32>
    %cst_19 = arith.constant dense<0.000000e+00> : vector<16x32xf32>
    %26 = tpu.matmul %25, %14, %cst_19 {dimension_numbers = #tpu.dot_dimension_numbers<[1], [0], [0], [1], [0, 0, 1, 1], [], []>} : vector<16x16xf32>, vector<16x32xf32>, vector<16x32xf32> -> vector<16x32xf32>
    %27 = vector.extract_strided_slice %7 {offsets = [0, 32], sizes = [16, 32], strides = [1, 1]} : vector<16x128xf32> to vector<16x32xf32>
    %28 = vector.extract_strided_slice %9 {offsets = [0, 32], sizes = [16, 32], strides = [1, 1]} : vector<16x128xf32> to vector<16x32xf32>
    %29 = vector.extract_strided_slice %11 {offsets = [0, 32], sizes = [16, 32], strides = [1, 1]} : vector<16x128xf32> to vector<16x32xf32>
    %cst_20 = arith.constant dense<0.000000e+00> : vector<16x16xf32>
    %30 = tpu.matmul %27, %28, %cst_20 {dimension_numbers = #tpu.dot_dimension_numbers<[1], [1], [0], [0], [0, 0, 1, 0], [], []>} : vector<16x32xf32>, vector<16x32xf32>, vector<16x16xf32> -> vector<16x16xf32>
    %cst_21 = arith.constant dense<0xFF800000> : vector<16xf32>
    %31 = vector.multi_reduction <maximumf>, %30, %cst_21 [1] : vector<16x16xf32> to vector<16xf32>
    %32 = vector.shape_cast %31 : vector<16xf32> to vector<16x1xf32>
    %33 = vector.broadcast %32 : vector<16x1xf32> to vector<16x16xf32>
    %34 = arith.subf %30, %33 : vector<16x16xf32>
    %35 = math.exp %34 : vector<16x16xf32>
    %cst_22 = arith.constant dense<0.000000e+00> : vector<16xf32>
    %36 = vector.multi_reduction <add>, %35, %cst_22 [1] : vector<16x16xf32> to vector<16xf32>
    %37 = vector.shape_cast %36 : vector<16xf32> to vector<16x1xf32>
    %38 = tpu.reciprocal %37 {approx = true} : vector<16x1xf32> -> vector<16x1xf32>
    %39 = vector.broadcast %38 : vector<16x1xf32> to vector<16x16xf32>
    %40 = arith.mulf %35, %39 : vector<16x16xf32>
    %cst_23 = arith.constant dense<0.000000e+00> : vector<16x32xf32>
    %41 = tpu.matmul %40, %29, %cst_23 {dimension_numbers = #tpu.dot_dimension_numbers<[1], [0], [0], [1], [0, 0, 1, 1], [], []>} : vector<16x16xf32>, vector<16x32xf32>, vector<16x32xf32> -> vector<16x32xf32>
    %42 = vector.extract_strided_slice %7 {offsets = [0, 64], sizes = [16, 32], strides = [1, 1]} : vector<16x128xf32> to vector<16x32xf32>
    %43 = vector.extract_strided_slice %9 {offsets = [0, 64], sizes = [16, 32], strides = [1, 1]} : vector<16x128xf32> to vector<16x32xf32>
    %44 = vector.extract_strided_slice %11 {offsets = [0, 64], sizes = [16, 32], strides = [1, 1]} : vector<16x128xf32> to vector<16x32xf32>
    %cst_24 = arith.constant dense<0.000000e+00> : vector<16x16xf32>
    %45 = tpu.matmul %42, %43, %cst_24 {dimension_numbers = #tpu.dot_dimension_numbers<[1], [1], [0], [0], [0, 0, 1, 0], [], []>} : vector<16x32xf32>, vector<16x32xf32>, vector<16x16xf32> -> vector<16x16xf32>
    %cst_25 = arith.constant dense<0xFF800000> : vector<16xf32>
    %46 = vector.multi_reduction <maximumf>, %45, %cst_25 [1] : vector<16x16xf32> to vector<16xf32>
    %47 = vector.shape_cast %46 : vector<16xf32> to vector<16x1xf32>
    %48 = vector.broadcast %47 : vector<16x1xf32> to vector<16x16xf32>
    %49 = arith.subf %45, %48 : vector<16x16xf32>
    %50 = math.exp %49 : vector<16x16xf32>
    %cst_26 = arith.constant dense<0.000000e+00> : vector<16xf32>
    %51 = vector.multi_reduction <add>, %50, %cst_26 [1] : vector<16x16xf32> to vector<16xf32>
    %52 = vector.shape_cast %51 : vector<16xf32> to vector<16x1xf32>
    %53 = tpu.reciprocal %52 {approx = true} : vector<16x1xf32> -> vector<16x1xf32>
    %54 = vector.broadcast %53 : vector<16x1xf32> to vector<16x16xf32>
    %55 = arith.mulf %50, %54 : vector<16x16xf32>
    %cst_27 = arith.constant dense<0.000000e+00> : vector<16x32xf32>
    %56 = tpu.matmul %55, %44, %cst_27 {dimension_numbers = #tpu.dot_dimension_numbers<[1], [0], [0], [1], [0, 0, 1, 1], [], []>} : vector<16x16xf32>, vector<16x32xf32>, vector<16x32xf32> -> vector<16x32xf32>
    %57 = vector.extract_strided_slice %7 {offsets = [0, 96], sizes = [16, 32], strides = [1, 1]} : vector<16x128xf32> to vector<16x32xf32>
    %58 = vector.extract_strided_slice %9 {offsets = [0, 96], sizes = [16, 32], strides = [1, 1]} : vector<16x128xf32> to vector<16x32xf32>
    %59 = vector.extract_strided_slice %11 {offsets = [0, 96], sizes = [16, 32], strides = [1, 1]} : vector<16x128xf32> to vector<16x32xf32>
    %cst_28 = arith.constant dense<0.000000e+00> : vector<16x16xf32>
    %60 = tpu.matmul %57, %58, %cst_28 {dimension_numbers = #tpu.dot_dimension_numbers<[1], [1], [0], [0], [0, 0, 1, 0], [], []>} : vector<16x32xf32>, vector<16x32xf32>, vector<16x16xf32> -> vector<16x16xf32>
    %cst_29 = arith.constant dense<0xFF800000> : vector<16xf32>
    %61 = vector.multi_reduction <maximumf>, %60, %cst_29 [1] : vector<16x16xf32> to vector<16xf32>
    %62 = vector.shape_cast %61 : vector<16xf32> to vector<16x1xf32>
    %63 = vector.broadcast %62 : vector<16x1xf32> to vector<16x16xf32>
    %64 = arith.subf %60, %63 : vector<16x16xf32>
    %65 = math.exp %64 : vector<16x16xf32>
    %cst_30 = arith.constant dense<0.000000e+00> : vector<16xf32>
    %66 = vector.multi_reduction <add>, %65, %cst_30 [1] : vector<16x16xf32> to vector<16xf32>
    %67 = vector.shape_cast %66 : vector<16xf32> to vector<16x1xf32>
    %68 = tpu.reciprocal %67 {approx = true} : vector<16x1xf32> -> vector<16x1xf32>
    %69 = vector.broadcast %68 : vector<16x1xf32> to vector<16x16xf32>
    %70 = arith.mulf %65, %69 : vector<16x16xf32>
    %cst_31 = arith.constant dense<0.000000e+00> : vector<16x32xf32>
    %71 = tpu.matmul %70, %59, %cst_31 {dimension_numbers = #tpu.dot_dimension_numbers<[1], [0], [0], [1], [0, 0, 1, 1], [], []>} : vector<16x16xf32>, vector<16x32xf32>, vector<16x32xf32> -> vector<16x32xf32>
    %72 = tpu.concatenate %26, %41, %56, %71 in 1 : vector<16x32xf32>, vector<16x32xf32>, vector<16x32xf32>, vector<16x32xf32> -> vector<16x128xf32>
    %c0_32 = arith.constant 0 : index
    %c0_33 = arith.constant 0 : index
    %c0_34 = arith.constant 0 : index
    %73 = vector.load %arg8[%c0_32, %c0_33, %c0_34] : memref<1x16x128xf32, #tpu.memory_space<vmem>>, vector<1x16x128xf32>
    %74 = vector.shape_cast %73 : vector<1x16x128xf32> to vector<16x128xf32>
    %75 = vector.shape_cast %72 : vector<16x128xf32> to vector<1x16x128xf32>
    tpu.vector_store %arg8[%c0_32, %c0_33, %c0_34], %75 {strides = array<i32>} : memref<1x16x128xf32, #tpu.memory_space<vmem>>, vector<1x16x128xf32>,
    return
  }
  func.func @transform_0(%arg0: i32, %arg1: i32) -> (i32, i32, i32) {
    %c0_i32 = arith.constant 0 : i32
    %c0_i32_0 = arith.constant 0 : i32
    return %arg0, %arg1, %c0_i32 : i32, i32, i32
  }
  func.func @transform_1(%arg0: i32, %arg1: i32) -> (i32, i32, i32) {
    %c0_i32 = arith.constant 0 : i32
    %c0_i32_0 = arith.constant 0 : i32
    %c0_i32_1 = arith.constant 0 : i32
    return %arg0, %c0_i32, %c0_i32_0 : i32, i32, i32
  }
  func.func @transform_2(%arg0: i32, %arg1: i32) -> (i32, i32, i32) {
    %c0_i32 = arith.constant 0 : i32
    %c0_i32_0 = arith.constant 0 : i32
    %c0_i32_1 = arith.constant 0 : i32
    return %arg0, %c0_i32, %c0_i32_0 : i32, i32, i32
  }
  func.func @transform_3(%arg0: i32, %arg1: i32) -> (i32, i32) {
    %c0_i32 = arith.constant 0 : i32
    %c0_i32_0 = arith.constant 0 : i32
    %c0_i32_1 = arith.constant 0 : i32
    return %c0_i32, %c0_i32_0 : i32, i32
  }
  func.func @transform_4(%arg0: i32, %arg1: i32) -> (i32, i32) {
    %c0_i32 = arith.constant 0 : i32
    %c0_i32_0 = arith.constant 0 : i32
    %c0_i32_1 = arith.constant 0 : i32
    return %c0_i32, %c0_i32_0 : i32, i32
  }
  func.func @transform_5(%arg0: i32, %arg1: i32) -> (i32, i32) {
    %c0_i32 = arith.constant 0 : i32
    %c0_i32_0 = arith.constant 0 : i32
    %c0_i32_1 = arith.constant 0 : i32
    return %c0_i32, %c0_i32_0 : i32, i32
  }
  func.func @transform_6(%arg0: i32, %arg1: i32) -> (i32, i32, i32) {
    %c0_i32 = arith.constant 0 : i32
    %c0_i32_0 = arith.constant 0 : i32
    return %arg0, %arg1, %c0_i32 : i32, i32, i32
  }
}

</mosaic_0001>

<llo_original>
// kernel: tpu_custom_call.1
$region0: #{tpu_custom_call.1}
  #allocation0 [shape = 'u32[]', space=smem, size = 0x4, offset = 0x4, fixed_abs, tag = 'smem constant byte address 0x4 - core index']
  #allocation1 [shape = 'u32[144,128]{1,0:T(1,128)}', space=vmem, size = 0x12000, scoped, tag = 'internal scratch']
  %s0 = inlined_call_operand.hbm [shape: f32[2,16,64], index: 0, kind: input, shape index: {}]
  %s1 = inlined_call_operand.hbm [shape: f32[2,16,64], index: 1, kind: input, shape index: {}]
  %s2 = inlined_call_operand.hbm [shape: f32[2,16,64], index: 2, kind: input, shape index: {}]
  %s3 = inlined_call_operand.hbm [shape: f32[64,128], index: 3, kind: input, shape index: {}]
  %s4 = inlined_call_operand.hbm [shape: f32[64,128], index: 4, kind: input, shape index: {}]
  %s5 = inlined_call_operand.hbm [shape: f32[64,128], index: 5, kind: input, shape index: {}]
  %s6 = inlined_call_operand.hbm [shape: f32[2,16,128], index: 6, kind: output, shape index: {}]
  %s7 = sld [smem:[#allocation0]]
  $region81: #{tpu_custom_call.1} parent=0
    _
  %s9 = ssub.s32 1, %s7
  %s10 = scalar_select 0, %s9, %s7
  $region1: #{tpu_custom_call.1} parent=0
    #allocation2 [shape = 'u8[16384]{0}', space=vmem, size = 0x4000, scoped, tag = 'input window, operand 0']
    #allocation3 [shape = 's32[2]{0}', space=sflag, size = 0x8, scoped, tag = 'scoped memory for tpu_custom_call.1']
    #allocation4 [shape = 's32[2]{0}', space=sflag, size = 0x8, scoped, tag = 'scoped memory for tpu_custom_call.1']
    #allocation5 [shape = 'u8[16384]{0}', space=vmem, size = 0x4000, scoped, tag = 'input window, operand 1']
    #allocation6 [shape = 's32[2]{0}', space=sflag, size = 0x8, scoped, tag = 'scoped memory for tpu_custom_call.1']
    #allocation7 [shape = 'u8[16384]{0}', space=vmem, size = 0x4000, scoped, tag = 'input window, operand 2']
    #allocation8 [shape = 'u8[32768]{0}', space=vmem, size = 0x8000, scoped, tag = 'input window, operand 3, single buffered']
    #allocation9 [shape = 's32[1]{0}', space=sflag, size = 0x4, scoped, tag = 'scoped memory for tpu_custom_call.1']
    #allocation10 [shape = 'u8[32768]{0}', space=vmem, size = 0x8000, scoped, tag = 'input window, operand 4, single buffered']
    #allocation11 [shape = 'u8[32768]{0}', space=vmem, size = 0x8000, scoped, tag = 'input window, operand 5, single buffered']
    #allocation12 [shape = 's32[1]{0}', space=sflag, size = 0x4, scoped, tag = 'scoped memory for tpu_custom_call.1']
    #allocation13 [shape = 'u8[16384]{0}', space=vmem, size = 0x4000, scoped, tag = 'output window, operand 0']
    %11 = vsyncpa [#allocation3], 0
    %s12 = scalar_lea.sflag [#allocation3], 1
    %13 = vsyncpa %s12, 0
    %14 = vsyncpa [#allocation6], 0
    %s15 = scalar_lea.sflag [#allocation6], 1
    %16 = vsyncpa %s15, 0
    %17 = vsyncpa [#allocation9], 0
    %18 = vsyncpa [#allocation12], 0
    %19 = vsyncpa [#allocation4], 0
    %s20 = scalar_lea.sflag [#allocation4], 1
    %21 = vsyncpa %s20, 0
    loop: start=0, step=1, limit=4
    $region2: #{tpu_custom_call.1} parent=1 // loop_pre_header
      _
    $region3: #{tpu_custom_call.1} parent=1 // loop_header
      %s23 = sphi 0, %s27
      %p24 = scmp.ge.s32.totalorder %s23, 4
      %s30 = sphi 0, %s42
      %s31 = sphi 0, %s38
      %s32 = sphi 0, %s30
      %s33 = sphi 0, %s31
      %s34 = sphi 0, %s32
      %s35 = sphi 0, %s33
      %s47 = sphi 0, %s49
      %s50 = sphi 0, %s47
      %s51 = sphi 0, %s50
      %s67 = sphi 0, %s51
      %s73 = sphi 0, %s75
      %s76 = sphi 0, %s73
      %s77 = sphi 0, %s76
      %s93 = sphi 0, %s77
      %s99 = sphi 0, %s101
      %s102 = sphi 0, %s99
      %s103 = sphi 0, %s102
      %s119 = sphi 0, %s103
      %s123 = sphi 0, %s123
      %s125 = sphi 0, %s123
      %s126 = sphi 0, %s125
      %s140 = sphi 0, %s126
      %s144 = sphi 0, %s144
      %s146 = sphi 0, %s144
      %s147 = sphi 0, %s146
      %s161 = sphi 0, %s147
      %s165 = sphi 0, %s165
      %s167 = sphi 0, %s165
      %s168 = sphi 0, %s167
      %s182 = sphi 0, %s168
      %s190 = sphi 0, %s192
      %s193 = sphi 0, %s190
      %s194 = sphi 0, %s193
      %s210 = sphi 0, %s194
    $region4: #{tpu_custom_call.1} parent=1 // loop_header_branch
      %26 = sbr.rel (%p24) target = $region8
    $region5: #{tpu_custom_call.1} parent=1 // loop_body
      %s28 = ssub.s32 %s23, 1
      %s29 = ssub.s32 %s23, 2
      %s36 = sadd.s32 1, %s31
      %p37 = scmp.ge.s32.totalorder %s36, 1
      %s38 = scalar_select %p37, 0, %s36
      %s39 = sadd.s32 1, %s30
      %s40 = scalar_select %p37, %s39, %s30
      %p41 = scmp.ge.s32.totalorder %s40, 2
      %s42 = scalar_select %p41, 0, %s40
      %s43 = ssub.s32 %s30, %s42
      %s44 = ssub.s32 %s31, %s38
      %s45 = sor.u32 %s43, %s44
      %p46 = scmp.eq.s32.totalorder %s45, 0
      %s48 = sadd.s32 %s47, 1
      %s49 = scalar_select %p46, %s47, %s48
      %p52 = pneg %p46
      %p53 = scmp.eq.s32.totalorder %s23, 1
      %p54 = por %p52, %p53
      %p55 = scmp.ne.s32.totalorder %s47, %s50
      %p56 = scmp.eq.s32.totalorder %s23, 0
      %p57 = por %p55, %p56
      %p58 = scmp.ne.s32.totalorder %s47, %s50
      %p59 = scmp.eq.s32.totalorder %s28, 1
      %p60 = por %p58, %p59
      %p61 = scmp.ne.s32.totalorder %s50, %s51
      %p62 = scmp.eq.s32.totalorder %s28, 0
      %p63 = por %p61, %p62
      %p64 = scmp.ne.s32.totalorder %s50, %s51
      %p65 = scmp.eq.s32.totalorder %s29, 1
      %p66 = por %p64, %p65
      %p68 = scmp.ne.s32.totalorder %s51, %s67
      %p69 = scmp.eq.s32.totalorder %s29, 0
      %p70 = por %p68, %p69
      %s71 = ssub.s32 %s30, %s42
      %p72 = scmp.eq.s32.totalorder %s71, 0
      %s74 = sadd.s32 %s73, 1
      %s75 = scalar_select %p72, %s73, %s74
      %p78 = pneg %p72
      %p79 = scmp.eq.s32.totalorder %s23, 1
      %p80 = por %p78, %p79
      %p81 = scmp.ne.s32.totalorder %s73, %s76
      %p82 = scmp.eq.s32.totalorder %s23, 0
      %p83 = por %p81, %p82
      %p84 = scmp.ne.s32.totalorder %s73, %s76
      %p85 = scmp.eq.s32.totalorder %s28, 1
      %p86 = por %p84, %p85
      %p87 = scmp.ne.s32.totalorder %s76, %s77
      %p88 = scmp.eq.s32.totalorder %s28, 0
      %p89 = por %p87, %p88
      %p90 = scmp.ne.s32.totalorder %s76, %s77
      %p91 = scmp.eq.s32.totalorder %s29, 1
      %p92 = por %p90, %p91
      %p94 = scmp.ne.s32.totalorder %s77, %s93
      %p95 = scmp.eq.s32.totalorder %s29, 0
      %p96 = por %p94, %p95
      %s97 = ssub.s32 %s30, %s42
      %p98 = scmp.eq.s32.totalorder %s97, 0
      %s100 = sadd.s32 %s99, 1
      %s101 = scalar_select %p98, %s99, %s100
      %p104 = pneg %p98
      %p105 = scmp.eq.s32.totalorder %s23, 1
      %p106 = por %p104, %p105
      %p107 = scmp.ne.s32.totalorder %s99, %s102
      %p108 = scmp.eq.s32.totalorder %s23, 0
      %p109 = por %p107, %p108
      %p110 = scmp.ne.s32.totalorder %s99, %s102
      %p111 = scmp.eq.s32.totalorder %s28, 1
      %p112 = por %p110, %p111
      %p113 = scmp.ne.s32.totalorder %s102, %s103
      %p114 = scmp.eq.s32.totalorder %s28, 0
      %p115 = por %p113, %p114
      %p116 = scmp.ne.s32.totalorder %s102, %s103
      %p117 = scmp.eq.s32.totalorder %s29, 1
      %p118 = por %p116, %p117
      %p120 = scmp.ne.s32.totalorder %s103, %s119
      %p121 = scmp.eq.s32.totalorder %s29, 0
      %p122 = por %p120, %p121
      %s124 = sadd.s32 %s123, 1
      %p127 = scmp.eq.s32.totalorder %s23, 1
      %p128 = scmp.ne.s32.totalorder %s123, %s125
      %p129 = scmp.eq.s32.totalorder %s23, 0
      %p130 = por %p128, %p129
      %p131 = scmp.ne.s32.totalorder %s123, %s125
      %p132 = scmp.eq.s32.totalorder %s28, 1
      %p133 = por %p131, %p132
      %p134 = scmp.ne.s32.totalorder %s125, %s126
      %p135 = scmp.eq.s32.totalorder %s28, 0
      %p136 = por %p134, %p135
      %p137 = scmp.ne.s32.totalorder %s125, %s126
      %p138 = scmp.eq.s32.totalorder %s29, 1
      %p139 = por %p137, %p138
      %p141 = scmp.ne.s32.totalorder %s126, %s140
      %p142 = scmp.eq.s32.totalorder %s29, 0
      %p143 = por %p141, %p142
      %s145 = sadd.s32 %s144, 1
      %p148 = scmp.eq.s32.totalorder %s23, 1
      %p149 = scmp.ne.s32.totalorder %s144, %s146
      %p150 = scmp.eq.s32.totalorder %s23, 0
      %p151 = por %p149, %p150
      %p152 = scmp.ne.s32.totalorder %s144, %s146
      %p153 = scmp.eq.s32.totalorder %s28, 1
      %p154 = por %p152, %p153
      %p155 = scmp.ne.s32.totalorder %s146, %s147
      %p156 = scmp.eq.s32.totalorder %s28, 0
      %p157 = por %p155, %p156
      %p158 = scmp.ne.s32.totalorder %s146, %s147
      %p159 = scmp.eq.s32.totalorder %s29, 1
      %p160 = por %p158, %p159
      %p162 = scmp.ne.s32.totalorder %s147, %s161
      %p163 = scmp.eq.s32.totalorder %s29, 0
      %p164 = por %p162, %p163
      %s166 = sadd.s32 %s165, 1
      %p169 = scmp.eq.s32.totalorder %s23, 1
      %p170 = scmp.ne.s32.totalorder %s165, %s167
      %p171 = scmp.eq.s32.totalorder %s23, 0
      %p172 = por %p170, %p171
      %p173 = scmp.ne.s32.totalorder %s165, %s167
      %p174 = scmp.eq.s32.totalorder %s28, 1
      %p175 = por %p173, %p174
      %p176 = scmp.ne.s32.totalorder %s167, %s168
      %p177 = scmp.eq.s32.totalorder %s28, 0
      %p178 = por %p176, %p177
      %p179 = scmp.ne.s32.totalorder %s167, %s168
      %p180 = scmp.eq.s32.totalorder %s29, 1
      %p181 = por %p179, %p180
      %p183 = scmp.ne.s32.totalorder %s168, %s182
      %p184 = scmp.eq.s32.totalorder %s29, 0
      %p185 = por %p183, %p184
      %s186 = ssub.s32 %s30, %s42
      %s187 = ssub.s32 %s31, %s38
      %s188 = sor.u32 %s186, %s187
      %p189 = scmp.eq.s32.totalorder %s188, 0
      %s191 = sadd.s32 %s190, 1
      %s192 = scalar_select %p189, %s190, %s191
      %p195 = pneg %p189
      %p196 = scmp.eq.s32.totalorder %s23, 1
      %p197 = por %p195, %p196
      %p198 = scmp.ne.s32.totalorder %s190, %s193
      %p199 = scmp.eq.s32.totalorder %s23, 0
      %p200 = por %p198, %p199
      %p201 = scmp.ne.s32.totalorder %s190, %s193
      %p202 = scmp.eq.s32.totalorder %s28, 1
      %p203 = por %p201, %p202
      %p204 = scmp.ne.s32.totalorder %s193, %s194
      %p205 = scmp.eq.s32.totalorder %s28, 0
      %p206 = por %p204, %p205
      %p207 = scmp.ne.s32.totalorder %s193, %s194
      %p208 = scmp.eq.s32.totalorder %s29, 1
      %p209 = por %p207, %p208
      %p211 = scmp.ne.s32.totalorder %s194, %s210
      %p212 = scmp.eq.s32.totalorder %s29, 0
      %p213 = por %p211, %p212
      %p214 = scmp.le.s32.totalorder 1, %s23
      %p215 = scmp.lt.s32.totalorder %s23, 3
      %p216 = pnand %p214, %p215
      %p217 = pneg %p216
      // Predicated region
      $region9: #{tpu_custom_call.1} parent=5 // pred_check
        _
      $region10: #{tpu_custom_call.1} parent=5 // pred_check_branch
        %219 = sbr.rel (%p216) target = $region12
      $region11: #{tpu_custom_call.1} parent=5 // pred_region
        %s220 = ssub.s32 %s23, 1
        // Predicated region
        $region13: #{tpu_custom_call.1} parent=11 // pred_check
          %p221 = pneg %p136
        $region14: #{tpu_custom_call.1} parent=11 // pred_check_branch
          %223 = sbr.rel (%p221) target = $region16
        $region15: #{tpu_custom_call.1} parent=11 // pred_region
          %s225 = ssub.s32 1024, 1024
          %226 = vsyncadd [#allocation9], %s225
          %s227 = sshll.u32 [#allocation8], 4
          %s228 = int_to_ptr.vmem [resolvable:$true] %s227
          %233 = dma.hbm_to_vmem [thread:$0]  %s3, 1024, %s228, [#allocation9], 128, 128, 8
        $region16: #{tpu_custom_call.1} parent=11 // pred_fallthru
          _
        // Predicated region
        $region17: #{tpu_custom_call.1} parent=11 // pred_check
          %p234 = pneg %p157
        $region18: #{tpu_custom_call.1} parent=11 // pred_check_branch
          %236 = sbr.rel (%p234) target = $region20
        $region19: #{tpu_custom_call.1} parent=11 // pred_region
          %s238 = ssub.s32 1024, 1024
          %239 = vsyncadd [#allocation9], %s238
          %s240 = sshll.u32 [#allocation10], 4
          %s241 = int_to_ptr.vmem [resolvable:$true] %s240
          %246 = dma.hbm_to_vmem [thread:$0]  %s4, 1024, %s241, [#allocation9], 128, 128, 8
        $region20: #{tpu_custom_call.1} parent=11 // pred_fallthru
          _
        // Predicated region
        $region21: #{tpu_custom_call.1} parent=11 // pred_check
          %p247 = pneg %p178
        $region22: #{tpu_custom_call.1} parent=11 // pred_check_branch
          %249 = sbr.rel (%p247) target = $region24
        $region23: #{tpu_custom_call.1} parent=11 // pred_region
          %s251 = ssub.s32 1024, 1024
          %252 = vsyncadd [#allocation12], %s251
          %s253 = sshll.u32 [#allocation11], 4
          %s254 = int_to_ptr.vmem [resolvable:$true] %s253
          %259 = dma.hbm_to_vmem [thread:$0]  %s5, 1024, %s254, [#allocation12], 128, 128, 8
        $region24: #{tpu_custom_call.1} parent=11 // pred_fallthru
          _
      $region12: #{tpu_custom_call.1} parent=5 // pred_fallthru
        _
      %p260 = scmp.lt.s32.totalorder %s23, 2
      // Predicated region
      $region25: #{tpu_custom_call.1} parent=5 // pred_check
        %p261 = pneg %p260
      $region26: #{tpu_custom_call.1} parent=5 // pred_check_branch
        %263 = sbr.rel (%p261) target = $region28
      $region27: #{tpu_custom_call.1} parent=5 // pred_region
        // Predicated region
        $region29: #{tpu_custom_call.1} parent=27 // pred_check
          %p264 = pneg %p57
        $region30: #{tpu_custom_call.1} parent=27 // pred_check_branch
          %266 = sbr.rel (%p264) target = $region32
        $region31: #{tpu_custom_call.1} parent=27 // pred_region
          %s267 = sand.u32 %s47, 1
          %s268 = scalar_lea.sflag [#allocation3], %s267
          %s269 = sand.u32 %s47, 1
          %s270 = smul.addr %s269, 16
          %s271 = scalar_lea.vmem [#allocation2], %s270
          %s272 = smul.u32 2, %s31
          %s274 = ssub.s32 256, 256
          %275 = vsyncadd %s268, %s274
          %s276 = smul.addr %s30, 2
          %s277 = sadd.s32 %s272, %s276
          %s278 = smul.addr %s277, 128
          %s279 = scalar_lea.hbm %s0, %s278
          %s280 = sshll.u32 %s271, 4
          %s281 = int_to_ptr.vmem [resolvable:$true] %s280
          %286 = dma.hbm_to_vmem [thread:$0]  %s279, 256, %s281, %s268, 128, 128, 8
        $region32: #{tpu_custom_call.1} parent=27 // pred_fallthru
          _
        // Predicated region
        $region33: #{tpu_custom_call.1} parent=27 // pred_check
          %p287 = pneg %p83
        $region34: #{tpu_custom_call.1} parent=27 // pred_check_branch
          %289 = sbr.rel (%p287) target = $region36
        $region35: #{tpu_custom_call.1} parent=27 // pred_region
          %s290 = sand.u32 %s23, 1
          %s291 = scalar_lea.sflag [#allocation6], %s290
          %s292 = sand.u32 %s73, 1
          %s293 = smul.addr %s292, 16
          %s294 = scalar_lea.vmem [#allocation5], %s293
          %s296 = ssub.s32 256, 256
          %297 = vsyncadd %s291, %s296
          %s298 = smul.addr %s30, 2
          %s299 = smul.addr %s298, 128
          %s300 = scalar_lea.hbm %s1, %s299
          %s301 = sshll.u32 %s294, 4
          %s302 = int_to_ptr.vmem [resolvable:$true] %s301
          %307 = dma.hbm_to_vmem [thread:$0]  %s300, 256, %s302, %s291, 128, 128, 8
        $region36: #{tpu_custom_call.1} parent=27 // pred_fallthru
          _
        // Predicated region
        $region37: #{tpu_custom_call.1} parent=27 // pred_check
          %p308 = pneg %p109
        $region38: #{tpu_custom_call.1} parent=27 // pred_check_branch
          %310 = sbr.rel (%p308) target = $region40
        $region39: #{tpu_custom_call.1} parent=27 // pred_region
          %s311 = sand.u32 %s23, 1
          %s312 = scalar_lea.sflag [#allocation6], %s311
          %s313 = sand.u32 %s99, 1
          %s314 = smul.addr %s313, 16
          %s315 = scalar_lea.vmem [#allocation7], %s314
          %s317 = ssub.s32 256, 256
          %318 = vsyncadd %s312, %s317
          %s319 = smul.addr %s30, 2
          %s320 = smul.addr %s319, 128
          %s321 = scalar_lea.hbm %s2, %s320
          %s322 = sshll.u32 %s315, 4
          %s323 = int_to_ptr.vmem [resolvable:$true] %s322
          %328 = dma.hbm_to_vmem [thread:$0]  %s321, 256, %s323, %s312, 128, 128, 8
        $region40: #{tpu_custom_call.1} parent=27 // pred_fallthru
          _
      $region28: #{tpu_custom_call.1} parent=5 // pred_fallthru
        _
      %p329 = scmp.le.s32.totalorder 1, %s23
      %p330 = scmp.lt.s32.totalorder %s23, 3
      %p331 = pnand %p329, %p330
      %p332 = pneg %p331
      // Predicated region
      $region41: #{tpu_custom_call.1} parent=5 // pred_check
        _
      $region42: #{tpu_custom_call.1} parent=5 // pred_check_branch
        %334 = sbr.rel (%p331) target = $region44
      $region43: #{tpu_custom_call.1} parent=5 // pred_region
        %s335 = ssub.s32 %s23, 1
        %s336 = sand.u32 %s50, 1
        %s337 = scalar_lea.sflag [#allocation3], %s336
        %s338 = sand.u32 %s50, 1
        %s339 = smul.addr %s338, 16
        %s340 = scalar_lea.vmem [#allocation2], %s339
        // Predicated region
        $region45: #{tpu_custom_call.1} parent=43 // pred_check
          %p341 = pneg %p63
        $region46: #{tpu_custom_call.1} parent=43 // pred_check_branch
          %343 = sbr.rel (%p341) target = $region48
        $region47: #{tpu_custom_call.1} parent=43 // pred_region
          %344 = dma.done %s337, 256
        $region48: #{tpu_custom_call.1} parent=43 // pred_fallthru
          _
        %s345 = sand.u32 %s28, 1
        %s346 = scalar_lea.sflag [#allocation6], %s345
        %s347 = sand.u32 %s76, 1
        %s348 = smul.addr %s347, 16
        %s349 = scalar_lea.vmem [#allocation5], %s348
        // Predicated region
        $region49: #{tpu_custom_call.1} parent=43 // pred_check
          %p350 = pneg %p89
        $region50: #{tpu_custom_call.1} parent=43 // pred_check_branch
          %352 = sbr.rel (%p350) target = $region52
        $region51: #{tpu_custom_call.1} parent=43 // pred_region
          %353 = dma.done %s346, 256
        $region52: #{tpu_custom_call.1} parent=43 // pred_fallthru
          _
        %s354 = sand.u32 %s28, 1
        %s355 = scalar_lea.sflag [#allocation6], %s354
        %s356 = sand.u32 %s102, 1
        %s357 = smul.addr %s356, 16
        %s358 = scalar_lea.vmem [#allocation7], %s357
        // Predicated region
        $region53: #{tpu_custom_call.1} parent=43 // pred_check
          %p359 = pneg %p115
        $region54: #{tpu_custom_call.1} parent=43 // pred_check_branch
          %361 = sbr.rel (%p359) target = $region56
        $region55: #{tpu_custom_call.1} parent=43 // pred_region
          %362 = dma.done %s355, 256
        $region56: #{tpu_custom_call.1} parent=43 // pred_fallthru
          _
        // Predicated region
        $region57: #{tpu_custom_call.1} parent=43 // pred_check
          %p363 = pneg %p136
        $region58: #{tpu_custom_call.1} parent=43 // pred_check_branch
          %365 = sbr.rel (%p363) target = $region60
        $region59: #{tpu_custom_call.1} parent=43 // pred_region
          %366 = dma.done [#allocation9], 1024
        $region60: #{tpu_custom_call.1} parent=43 // pred_fallthru
          _
        // Predicated region
        $region61: #{tpu_custom_call.1} parent=43 // pred_check
          %p367 = pneg %p157
        $region62: #{tpu_custom_call.1} parent=43 // pred_check_branch
          %369 = sbr.rel (%p367) target = $region64
        $region63: #{tpu_custom_call.1} parent=43 // pred_region
          %370 = dma.done [#allocation9], 1024
        $region64: #{tpu_custom_call.1} parent=43 // pred_fallthru
          _
        // Predicated region
        $region65: #{tpu_custom_call.1} parent=43 // pred_check
          %p371 = pneg %p178
        $region66: #{tpu_custom_call.1} parent=43 // pred_check_branch
          %373 = sbr.rel (%p371) target = $region68
        $region67: #{tpu_custom_call.1} parent=43 // pred_region
          %374 = dma.done [#allocation12], 1024
        $region68: #{tpu_custom_call.1} parent=43 // pred_fallthru
          _
        %s375 = sand.u32 %s50, 1
        %s376 = scalar_lea.sflag [#allocation3], %s375
        %s377 = sand.u32 %s50, 1
        %s378 = smul.addr %s377, 16
        %s379 = scalar_lea.vmem [#allocation2], %s378
        %p380 = pneg %p63
        %p381 = pneg %p60
        %s382 = sand.u32 %s28, 1
        %s383 = scalar_lea.sflag [#allocation6], %s382
        %s384 = sand.u32 %s76, 1
        %s385 = smul.addr %s384, 16
        %s386 = scalar_lea.vmem [#allocation5], %s385
        %p387 = pneg %p89
        %p388 = pneg %p86
        %s389 = sand.u32 %s28, 1
        %s390 = scalar_lea.sflag [#allocation6], %s389
        %s391 = sand.u32 %s102, 1
        %s392 = smul.addr %s391, 16
        %s393 = scalar_lea.vmem [#allocation7], %s392
        %p394 = pneg %p115
        %p395 = pneg %p112
        %p396 = pneg %p136
        %p397 = pneg %p133
        %p398 = pneg %p157
        %p399 = pneg %p154
        %p400 = pneg %p178
        %p401 = pneg %p175
        %p402 = pneg %p206
        %p403 = pneg %p203
        %s404 = sand.u32 %s193, 1
        %s405 = scalar_lea.sflag [#allocation4], %s404
        %s406 = sand.u32 %s193, 1
        %s407 = smul.addr %s406, 16
        %s408 = scalar_lea.vmem [#allocation13], %s407
        %s409 = smul.u32 2, %s33
        %s410 = smul.u32 2, %s33
        %v411 = vld [vmem:[%s340] sm:$0xff]
        %v412 = vld [vmem:[%s340 + $0x8] sm:$0xff]
        %v413 = vld [vmem:[%s349] sm:$0xff]
        %v414 = vld [vmem:[%s349 + $0x8] sm:$0xff]
        %v415 = vld [vmem:[%s358] sm:$0xff]
        %v416 = vld [vmem:[%s358 + $0x8] sm:$0xff]
        %v417 = vld [vmem:[#allocation8] sm:$0xff]
        %v418 = vld [vmem:[#allocation8 + $0x8] sm:$0xff]
        %v419 = vld [vmem:[#allocation8 + $0x10] sm:$0xff]
        %v420 = vld [vmem:[#allocation8 + $0x18] sm:$0xff]
        %v421 = vld [vmem:[#allocation8 + $0x20] sm:$0xff]
        %v422 = vld [vmem:[#allocation8 + $0x28] sm:$0xff]
        %v423 = vld [vmem:[#allocation8 + $0x30] sm:$0xff]
        %v424 = vld [vmem:[#allocation8 + $0x38] sm:$0xff]
        %vm425 = vcmask 523264
        %v427 = vsel %vm425, %v411, 0
        %v430 = vsel %vm425, %v412, 0
        %432 = vmatprep.subr.mxu0 0.0
        %433 = vmatpush1.msra.mxu0 0.0
        %434 = vmatprep.subr.mxu0 0.0
        %435 = vmatpush1.msra.mxu0 0.0
        %436 = vmatprep.subr.mxu0 0.0
        %437 = vmatpush1.msra.mxu0 0.0
        %438 = vmatprep.subr.mxu0 0.0
        %439 = vmatpush1.msra.mxu0 0.0
        %440 = vmatprep.subr.mxu0 0.0
        %441 = vmatpush1.msra.mxu0 0.0
        %442 = vmatprep.subr.mxu0 0.0
        %443 = vmatpush1.msra.mxu0 0.0
        %444 = vmatprep.subr.mxu0 0.0
        %445 = vmatpush1.msra.mxu0 0.0
        %446 = vmatprep.subr.mxu0 0.0
        %447 = vmatpush1.msra.mxu0 0.0
        %448 = vmatprep.subr.mxu0 0.0
        %449 = vmatpush1.msra.mxu0 %v424
        %450 = vmatprep.subr.mxu0 0.0
        %451 = vmatpush1.msra.mxu0 %v423
        %452 = vmatprep.subr.mxu0 0.0
        %453 = vmatpush1.msra.mxu0 %v422
        %454 = vmatprep.subr.mxu0 0.0
        %455 = vmatpush1.msra.mxu0 %v421
        %456 = vmatprep.subr.mxu0 0.0
        %457 = vmatpush1.msra.mxu0 %v420
        %458 = vmatprep.subr.mxu0 0.0
        %459 = vmatpush1.msra.mxu0 %v419
        %460 = vmatprep.subr.mxu0 0.0
        %461 = vmatpush1.msra.mxu0 %v418
        %462 = vmatprep.subr.mxu0 0.0
        %463 = vmatpush1.msra.mxu0 %v417
        %464 = vmatprep.subr.mxu0 0.0
        %465 = vmatpush2.msra.mxu0 0.0
        %466 = vmatprep.subr.mxu0 0.0
        %467 = vmatpush2.msra.mxu0 0.0
        %468 = vmatprep.subr.mxu0 0.0
        %469 = vmatpush2.msra.mxu0 0.0
        %470 = vmatprep.subr.mxu0 0.0
        %471 = vmatpush2.msra.mxu0 0.0
        %472 = vmatprep.subr.mxu0 0.0
        %473 = vmatpush2.msra.mxu0 0.0
        %474 = vmatprep.subr.mxu0 0.0
        %475 = vmatpush2.msra.mxu0 0.0
        %476 = vmatprep.subr.mxu0 0.0
        %477 = vmatpush2.msra.mxu0 0.0
        %478 = vmatprep.subr.mxu0 0.0
        %479 = vmatpush2.msra.mxu0 0.0
        %480 = vmatprep.subr.mxu0 0.0
        %481 = vmatpush2.msra.mxu0 0.0
        %482 = vmatprep.subr.mxu0 0.0
        %483 = vmatpush2.msra.mxu0 0.0
        %484 = vmatprep.subr.mxu0 0.0
        %485 = vmatpush2.msra.mxu0 0.0
        %486 = vmatprep.subr.mxu0 0.0
        %487 = vmatpush2.msra.mxu0 0.0
        %488 = vmatprep.subr.mxu0 0.0
        %489 = vmatpush2.msra.mxu0 0.0
        %490 = vmatprep.subr.mxu0 0.0
        %491 = vmatpush2.msra.mxu0 0.0
        %492 = vmatprep.subr.mxu0 0.0
        %493 = vmatpush2.msra.mxu0 0.0
        %494 = vmatprep.subr.mxu0 0.0
        %495 = vmatpush2.msra.mxu0 0.0
        %496 = vmatprep.mubr.f32.mxu0 0.0
        %497 = vmatmul.mubr.f32.gmra.mxu0 %v427
        %v498 = vpop.f32.mrf.mxu0
        %v499 = vadd.f32 0.0, %v498
        %v500 = vpop.f32.mrf.mxu0
        %501 = vmatprep.mubr.f32.mxu0 0.0
        %502 = vmatmul.mubr.f32.gmra.mxu0 %v430
        %v503 = vpop.f32.mrf.mxu0
        %v504 = vadd.f32 0.0, %v503
        %v505 = vpop.f32.mrf.mxu0
        %506 = vdwg.mxu0
        %v507 = vld [vmem:[#allocation10] sm:$0xff]
        %v508 = vld [vmem:[#allocation10 + $0x8] sm:$0xff]
        %v509 = vld [vmem:[#allocation10 + $0x10] sm:$0xff]
        %v510 = vld [vmem:[#allocation10 + $0x18] sm:$0xff]
        %v511 = vld [vmem:[#allocation10 + $0x20] sm:$0xff]
        %v512 = vld [vmem:[#allocation10 + $0x28] sm:$0xff]
        %v513 = vld [vmem:[#allocation10 + $0x30] sm:$0xff]
        %v514 = vld [vmem:[#allocation10 + $0x38] sm:$0xff]
        %v516 = vsel %vm425, %v413, 0
        %v519 = vsel %vm425, %v414, 0
        %521 = vmatprep.subr.mxu0 0.0
        %522 = vmatpush1.msra.mxu0 0.0
        %523 = vmatprep.subr.mxu0 0.0
        %524 = vmatpush1.msra.mxu0 0.0
        %525 = vmatprep.subr.mxu0 0.0
        %526 = vmatpush1.msra.mxu0 0.0
        %527 = vmatprep.subr.mxu0 0.0
        %528 = vmatpush1.msra.mxu0 0.0
        %529 = vmatprep.subr.mxu0 0.0
        %530 = vmatpush1.msra.mxu0 0.0
        %531 = vmatprep.subr.mxu0 0.0
        %532 = vmatpush1.msra.mxu0 0.0
        %533 = vmatprep.subr.mxu0 0.0
        %534 = vmatpush1.msra.mxu0 0.0
        %535 = vmatprep.subr.mxu0 0.0
        %536 = vmatpush1.msra.mxu0 0.0
        %537 = vmatprep.subr.mxu0 0.0
        %538 = vmatpush1.msra.mxu0 %v514
        %539 = vmatprep.subr.mxu0 0.0
        %540 = vmatpush1.msra.mxu0 %v513
        %541 = vmatprep.subr.mxu0 0.0
        %542 = vmatpush1.msra.mxu0 %v512
        %543 = vmatprep.subr.mxu0 0.0
        %544 = vmatpush1.msra.mxu0 %v511
        %545 = vmatprep.subr.mxu0 0.0
        %546 = vmatpush1.msra.mxu0 %v510
        %547 = vmatprep.subr.mxu0 0.0
        %548 = vmatpush1.msra.mxu0 %v509
        %549 = vmatprep.subr.mxu0 0.0
        %550 = vmatpush1.msra.mxu0 %v508
        %551 = vmatprep.subr.mxu0 0.0
        %552 = vmatpush1.msra.mxu0 %v507
        %553 = vmatprep.subr.mxu0 0.0
        %554 = vmatpush2.msra.mxu0 0.0
        %555 = vmatprep.subr.mxu0 0.0
        %556 = vmatpush2.msra.mxu0 0.0
        %557 = vmatprep.subr.mxu0 0.0
        %558 = vmatpush2.msra.mxu0 0.0
        %559 = vmatprep.subr.mxu0 0.0
        %560 = vmatpush2.msra.mxu0 0.0
        %561 = vmatprep.subr.mxu0 0.0
        %562 = vmatpush2.msra.mxu0 0.0
        %563 = vmatprep.subr.mxu0 0.0
        %564 = vmatpush2.msra.mxu0 0.0
        %565 = vmatprep.subr.mxu0 0.0
        %566 = vmatpush2.msra.mxu0 0.0
        %567 = vmatprep.subr.mxu0 0.0
        %568 = vmatpush2.msra.mxu0 0.0
        %569 = vmatprep.subr.mxu0 0.0
        %570 = vmatpush2.msra.mxu0 0.0
        %571 = vmatprep.subr.mxu0 0.0
        %572 = vmatpush2.msra.mxu0 0.0
        %573 = vmatprep.subr.mxu0 0.0
        %574 = vmatpush2.msra.mxu0 0.0
        %575 = vmatprep.subr.mxu0 0.0
        %576 = vmatpush2.msra.mxu0 0.0
        %577 = vmatprep.subr.mxu0 0.0
        %578 = vmatpush2.msra.mxu0 0.0
        %579 = vmatprep.subr.mxu0 0.0
        %580 = vmatpush2.msra.mxu0 0.0
        %581 = vmatprep.subr.mxu0 0.0
        %582 = vmatpush2.msra.mxu0 0.0
        %583 = vmatprep.subr.mxu0 0.0
        %584 = vmatpush2.msra.mxu0 0.0
        %585 = vmatprep.mubr.f32.mxu0 0.0
        %586 = vmatmul.mubr.f32.gmra.mxu0 %v516
        %v587 = vpop.f32.mrf.mxu0
        %v588 = vadd.f32 0.0, %v587
        %v589 = vpop.f32.mrf.mxu0
        %590 = vmatprep.mubr.f32.mxu0 0.0
        %591 = vmatmul.mubr.f32.gmra.mxu0 %v519
        %v592 = vpop.f32.mrf.mxu0
        %v593 = vadd.f32 0.0, %v592
        %v594 = vpop.f32.mrf.mxu0
        %595 = vdwg.mxu0
        %v596 = vld [vmem:[#allocation11] sm:$0xff]
        %v597 = vld [vmem:[#allocation11 + $0x8] sm:$0xff]
        %v598 = vld [vmem:[#allocation11 + $0x10] sm:$0xff]
        %v599 = vld [vmem:[#allocation11 + $0x18] sm:$0xff]
        %v600 = vld [vmem:[#allocation11 + $0x20] sm:$0xff]
        %v601 = vld [vmem:[#allocation11 + $0x28] sm:$0xff]
        %v602 = vld [vmem:[#allocation11 + $0x30] sm:$0xff]
        %v603 = vld [vmem:[#allocation11 + $0x38] sm:$0xff]
        %v605 = vsel %vm425, %v415, 0
        %v608 = vsel %vm425, %v416, 0
        %610 = vmatprep.subr.mxu0 0.0
        %611 = vmatpush1.msra.mxu0 0.0
        %612 = vmatprep.subr.mxu0 0.0
        %613 = vmatpush1.msra.mxu0 0.0
        %614 = vmatprep.subr.mxu0 0.0
        %615 = vmatpush1.msra.mxu0 0.0
        %616 = vmatprep.subr.mxu0 0.0
        %617 = vmatpush1.msra.mxu0 0.0
        %618 = vmatprep.subr.mxu0 0.0
        %619 = vmatpush1.msra.mxu0 0.0
        %620 = vmatprep.subr.mxu0 0.0
        %621 = vmatpush1.msra.mxu0 0.0
        %622 = vmatprep.subr.mxu0 0.0
        %623 = vmatpush1.msra.mxu0 0.0
        %624 = vmatprep.subr.mxu0 0.0
        %625 = vmatpush1.msra.mxu0 0.0
        %626 = vmatprep.subr.mxu0 0.0
        %627 = vmatpush1.msra.mxu0 %v603
        %628 = vmatprep.subr.mxu0 0.0
        %629 = vmatpush1.msra.mxu0 %v602
        %630 = vmatprep.subr.mxu0 0.0
        %631 = vmatpush1.msra.mxu0 %v601
        %632 = vmatprep.subr.mxu0 0.0
        %633 = vmatpush1.msra.mxu0 %v600
        %634 = vmatprep.subr.mxu0 0.0
        %635 = vmatpush1.msra.mxu0 %v599
        %636 = vmatprep.subr.mxu0 0.0
        %637 = vmatpush1.msra.mxu0 %v598
        %638 = vmatprep.subr.mxu0 0.0
        %639 = vmatpush1.msra.mxu0 %v597
        %640 = vmatprep.subr.mxu0 0.0
        %641 = vmatpush1.msra.mxu0 %v596
        %642 = vmatprep.subr.mxu0 0.0
        %643 = vmatpush2.msra.mxu0 0.0
        %644 = vmatprep.subr.mxu0 0.0
        %645 = vmatpush2.msra.mxu0 0.0
        %646 = vmatprep.subr.mxu0 0.0
        %647 = vmatpush2.msra.mxu0 0.0
        %648 = vmatprep.subr.mxu0 0.0
        %649 = vmatpush2.msra.mxu0 0.0
        %650 = vmatprep.subr.mxu0 0.0
        %651 = vmatpush2.msra.mxu0 0.0
        %652 = vmatprep.subr.mxu0 0.0
        %653 = vmatpush2.msra.mxu0 0.0
        %654 = vmatprep.subr.mxu0 0.0
        %655 = vmatpush2.msra.mxu0 0.0
        %656 = vmatprep.subr.mxu0 0.0
        %657 = vmatpush2.msra.mxu0 0.0
        %658 = vmatprep.subr.mxu0 0.0
        %659 = vmatpush2.msra.mxu0 0.0
        %660 = vmatprep.subr.mxu0 0.0
        %661 = vmatpush2.msra.mxu0 0.0
        %662 = vmatprep.subr.mxu0 0.0
        %663 = vmatpush2.msra.mxu0 0.0
        %664 = vmatprep.subr.mxu0 0.0
        %665 = vmatpush2.msra.mxu0 0.0
        %666 = vmatprep.subr.mxu0 0.0
        %667 = vmatpush2.msra.mxu0 0.0
        %668 = vmatprep.subr.mxu0 0.0
        %669 = vmatpush2.msra.mxu0 0.0
        %670 = vmatprep.subr.mxu0 0.0
        %671 = vmatpush2.msra.mxu0 0.0
        %672 = vmatprep.subr.mxu0 0.0
        %673 = vmatpush2.msra.mxu0 0.0
        %674 = vmatprep.mubr.f32.mxu0 0.0
        %675 = vmatmul.mubr.f32.gmra.mxu0 %v605
        %v676 = vpop.f32.mrf.mxu0
        %v677 = vadd.f32 0.0, %v676
        %v678 = vpop.f32.mrf.mxu0
        %679 = vmatprep.mubr.f32.mxu0 0.0
        %680 = vmatmul.mubr.f32.gmra.mxu0 %v608
        %v681 = vpop.f32.mrf.mxu0
        %v682 = vadd.f32 0.0, %v681
        %v683 = vpop.f32.mrf.mxu0
        %684 = vdwg.mxu0
        %vm685 = vcmask 261120
        %v687 = vsel %vm685, %v499, 0
        %v690 = vsel %vm685, %v504, 0
        %v693 = vsel %vm685, %v588, 0
        %v696 = vsel %vm685, %v593, 0
        %698 = vmatprep.subr.mxu0 0.0
        %699 = vmatpush1.xpose.msra.mxu0 0.0
        %700 = vmatprep.subr.mxu0 0.0
        %701 = vmatpush1.xpose.msra.mxu0 0.0
        %702 = vmatprep.subr.mxu0 0.0
        %703 = vmatpush1.xpose.msra.mxu0 0.0
        %704 = vmatprep.subr.mxu0 0.0
        %705 = vmatpush1.xpose.msra.mxu0 0.0
        %706 = vmatprep.subr.mxu0 0.0
        %707 = vmatpush1.xpose.msra.mxu0 0.0
        %708 = vmatprep.subr.mxu0 0.0
        %709 = vmatpush1.xpose.msra.mxu0 0.0
        %710 = vmatprep.subr.mxu0 0.0
        %711 = vmatpush1.xpose.msra.mxu0 0.0
        %712 = vmatprep.subr.mxu0 0.0
        %713 = vmatpush1.xpose.msra.mxu0 0.0
        %714 = vmatprep.subr.mxu0 0.0
        %715 = vmatpush1.xpose.msra.mxu0 0.0
        %716 = vmatprep.subr.mxu0 0.0
        %717 = vmatpush1.xpose.msra.mxu0 0.0
        %718 = vmatprep.subr.mxu0 0.0
        %719 = vmatpush1.xpose.msra.mxu0 0.0
        %720 = vmatprep.subr.mxu0 0.0
        %721 = vmatpush1.xpose.msra.mxu0 0.0
        %722 = vmatprep.subr.mxu0 0.0
        %723 = vmatpush1.xpose.msra.mxu0 0.0
        %724 = vmatprep.subr.mxu0 0.0
        %725 = vmatpush1.xpose.msra.mxu0 0.0
        %726 = vmatprep.subr.mxu0 0.0
        %727 = vmatpush1.xpose.msra.mxu0 %v696
        %728 = vmatprep.subr.mxu0 0.0
        %729 = vmatpush1.xpose.msra.mxu0 %v693
        %730 = vmatprep.subr.mxu0 0.0
        %731 = vmatpush2.xpose.msra.mxu0 0.0
        %732 = vmatprep.subr.mxu0 0.0
        %733 = vmatpush2.xpose.msra.mxu0 0.0
        %734 = vmatprep.subr.mxu0 0.0
        %735 = vmatpush2.xpose.msra.mxu0 0.0
        %736 = vmatprep.subr.mxu0 0.0
        %737 = vmatpush2.xpose.msra.mxu0 0.0
        %738 = vmatprep.subr.mxu0 0.0
        %739 = vmatpush2.xpose.msra.mxu0 0.0
        %740 = vmatprep.subr.mxu0 0.0
        %741 = vmatpush2.xpose.msra.mxu0 0.0
        %742 = vmatprep.subr.mxu0 0.0
        %743 = vmatpush2.xpose.msra.mxu0 0.0
        %744 = vmatprep.subr.mxu0 0.0
        %745 = vmatpush2.xpose.msra.mxu0 0.0
        %746 = vmatprep.subr.mxu0 0.0
        %747 = vmatpush2.xpose.msra.mxu0 0.0
        %748 = vmatprep.subr.mxu0 0.0
        %749 = vmatpush2.xpose.msra.mxu0 0.0
        %750 = vmatprep.subr.mxu0 0.0
        %751 = vmatpush2.xpose.msra.mxu0 0.0
        %752 = vmatprep.subr.mxu0 0.0
        %753 = vmatpush2.xpose.msra.mxu0 0.0
        %754 = vmatprep.subr.mxu0 0.0
        %755 = vmatpush2.xpose.msra.mxu0 0.0
        %756 = vmatprep.subr.mxu0 0.0
        %757 = vmatpush2.xpose.msra.mxu0 0.0
        %758 = vmatprep.subr.mxu0 0.0
        %759 = vmatpush2.xpose.msra.mxu0 0.0
        %760 = vmatprep.subr.mxu0 0.0
        %761 = vmatpush2.xpose.msra.mxu0 0.0
        %762 = vmatprep.mubr.f32.mxu0 0.0
        %763 = vmatmul.mubr.f32.gmra.mxu0 %v687
        %v764 = vpop.f32.mrf.mxu0
        %v765 = vadd.f32 0.0, %v764
        %v766 = vpop.f32.mrf.mxu0
        %767 = vmatprep.mubr.f32.mxu0 0.0
        %768 = vmatmul.mubr.f32.gmra.mxu0 %v690
        %v769 = vpop.f32.mrf.mxu0
        %v770 = vadd.f32 0.0, %v769
        %v771 = vpop.f32.mrf.mxu0
        %772 = vdwg.mxu0
        %vm773 = vcmask 130048
        %v774 = vsel %vm773, %v765, -inf
        %775 = vmax.xlane.f32.xlu0 %v774
        %v776 = vpop.xlane.xlu0 %775
        %v777 = vsel %vm773, %v770, -inf
        %778 = vmax.xlane.f32.xlu0 %v777
        %v779 = vpop.xlane.xlu0 %778
        %v780 = vsub.f32 %v765, %v776
        %v781 = vsub.f32 %v770, %v779
        %v782 = vmul.f32 %v780, 1.442695
        %v783 = vpow.pop %v782
        %v784 = vmul.f32 %v781, 1.442695
        %v785 = vpow.pop %v784
        %v786 = vsel %vm773, %v783, 0.0
        %787 = vadd.xlane.f32.xlu0 %v786
        %v788 = vpop.xlane.xlu0 %787
        %v789 = vsel %vm773, %v785, 0.0
        %790 = vadd.xlane.f32.xlu0 %v789
        %v791 = vpop.xlane.xlu0 %790
        %v792 = vrcp.pop %v788
        %v793 = vrcp.pop %v791
        %v794 = vmul.f32 %v783, %v792
        %v795 = vmul.f32 %v785, %v793
        %v797 = vsel %vm773, %v794, 0
        %v800 = vsel %vm773, %v795, 0
        %802 = vmatprep.subr.mxu0 0.0
        %803 = vmatpush1.msra.mxu0 0.0
        %804 = vmatprep.subr.mxu0 0.0
        %805 = vmatpush1.msra.mxu0 0.0
        %806 = vmatprep.subr.mxu0 0.0
        %807 = vmatpush1.msra.mxu0 0.0
        %808 = vmatprep.subr.mxu0 0.0
        %809 = vmatpush1.msra.mxu0 0.0
        %810 = vmatprep.subr.mxu0 0.0
        %811 = vmatpush1.msra.mxu0 0.0
        %812 = vmatprep.subr.mxu0 0.0
        %813 = vmatpush1.msra.mxu0 0.0
        %814 = vmatprep.subr.mxu0 0.0
        %815 = vmatpush1.msra.mxu0 0.0
        %816 = vmatprep.subr.mxu0 0.0
        %817 = vmatpush1.msra.mxu0 0.0
        %818 = vmatprep.subr.mxu0 0.0
        %819 = vmatpush1.msra.mxu0 0.0
        %820 = vmatprep.subr.mxu0 0.0
        %821 = vmatpush1.msra.mxu0 0.0
        %822 = vmatprep.subr.mxu0 0.0
        %823 = vmatpush1.msra.mxu0 0.0
        %824 = vmatprep.subr.mxu0 0.0
        %825 = vmatpush1.msra.mxu0 0.0
        %826 = vmatprep.subr.mxu0 0.0
        %827 = vmatpush1.msra.mxu0 0.0
        %828 = vmatprep.subr.mxu0 0.0
        %829 = vmatpush1.msra.mxu0 0.0
        %830 = vmatprep.subr.mxu0 0.0
        %831 = vmatpush1.msra.mxu0 %v682
        %832 = vmatprep.subr.mxu0 0.0
        %833 = vmatpush1.msra.mxu0 %v677
        %834 = vmatprep.subr.mxu0 0.0
        %835 = vmatpush2.msra.mxu0 0.0
        %836 = vmatprep.subr.mxu0 0.0
        %837 = vmatpush2.msra.mxu0 0.0
        %838 = vmatprep.subr.mxu0 0.0
        %839 = vmatpush2.msra.mxu0 0.0
        %840 = vmatprep.subr.mxu0 0.0
        %841 = vmatpush2.msra.mxu0 0.0
        %842 = vmatprep.subr.mxu0 0.0
        %843 = vmatpush2.msra.mxu0 0.0
        %844 = vmatprep.subr.mxu0 0.0
        %845 = vmatpush2.msra.mxu0 0.0
        %846 = vmatprep.subr.mxu0 0.0
        %847 = vmatpush2.msra.mxu0 0.0
        %848 = vmatprep.subr.mxu0 0.0
        %849 = vmatpush2.msra.mxu0 0.0
        %850 = vmatprep.subr.mxu0 0.0
        %851 = vmatpush2.msra.mxu0 0.0
        %852 = vmatprep.subr.mxu0 0.0
        %853 = vmatpush2.msra.mxu0 0.0
        %854 = vmatprep.subr.mxu0 0.0
        %855 = vmatpush2.msra.mxu0 0.0
        %856 = vmatprep.subr.mxu0 0.0
        %857 = vmatpush2.msra.mxu0 0.0
        %858 = vmatprep.subr.mxu0 0.0
        %859 = vmatpush2.msra.mxu0 0.0
        %860 = vmatprep.subr.mxu0 0.0
        %861 = vmatpush2.msra.mxu0 0.0
        %862 = vmatprep.subr.mxu0 0.0
        %863 = vmatpush2.msra.mxu0 0.0
        %864 = vmatprep.subr.mxu0 0.0
        %865 = vmatpush2.msra.mxu0 0.0
        %866 = vmatprep.mubr.f32.mxu0 0.0
        %867 = vmatmul.mubr.f32.gmra.mxu0 %v797
        %v868 = vpop.f32.mrf.mxu0
        %v869 = vadd.f32 0.0, %v868
        %v870 = vpop.f32.mrf.mxu0
        %871 = vmatprep.mubr.f32.mxu0 0.0
        %872 = vmatmul.mubr.f32.gmra.mxu0 %v800
        %v873 = vpop.f32.mrf.mxu0
        %v874 = vadd.f32 0.0, %v873
        %v875 = vpop.f32.mrf.mxu0
        %876 = vdwg.mxu0
        %877 = vrot.lane.b32.xlu0 %v499, 96
        %v878 = vpop.permute.xlu0 %877
        %879 = vrot.lane.b32.xlu0 %v504, 96
        %v880 = vpop.permute.xlu0 %879
        %881 = vrot.lane.b32.xlu0 %v588, 96
        %v882 = vpop.permute.xlu0 %881
        %883 = vrot.lane.b32.xlu0 %v593, 96
        %v884 = vpop.permute.xlu0 %883
        %v885 = vsel %vm685, %v878, 0
        %v887 = vsel %vm685, %v880, 0
        %v889 = vsel %vm685, %v882, 0
        %v891 = vsel %vm685, %v884, 0
        %893 = vmatprep.subr.mxu0 0.0
        %894 = vmatpush1.xpose.msra.mxu0 0.0
        %895 = vmatprep.subr.mxu0 0.0
        %896 = vmatpush1.xpose.msra.mxu0 0.0
        %897 = vmatprep.subr.mxu0 0.0
        %898 = vmatpush1.xpose.msra.mxu0 0.0
        %899 = vmatprep.subr.mxu0 0.0
        %900 = vmatpush1.xpose.msra.mxu0 0.0
        %901 = vmatprep.subr.mxu0 0.0
        %902 = vmatpush1.xpose.msra.mxu0 0.0
        %903 = vmatprep.subr.mxu0 0.0
        %904 = vmatpush1.xpose.msra.mxu0 0.0
        %905 = vmatprep.subr.mxu0 0.0
        %906 = vmatpush1.xpose.msra.mxu0 0.0
        %907 = vmatprep.subr.mxu0 0.0
        %908 = vmatpush1.xpose.msra.mxu0 0.0
        %909 = vmatprep.subr.mxu0 0.0
        %910 = vmatpush1.xpose.msra.mxu0 0.0
        %911 = vmatprep.subr.mxu0 0.0
        %912 = vmatpush1.xpose.msra.mxu0 0.0
        %913 = vmatprep.subr.mxu0 0.0
        %914 = vmatpush1.xpose.msra.mxu0 0.0
        %915 = vmatprep.subr.mxu0 0.0
        %916 = vmatpush1.xpose.msra.mxu0 0.0
        %917 = vmatprep.subr.mxu0 0.0
        %918 = vmatpush1.xpose.msra.mxu0 0.0
        %919 = vmatprep.subr.mxu0 0.0
        %920 = vmatpush1.xpose.msra.mxu0 0.0
        %921 = vmatprep.subr.mxu0 0.0
        %922 = vmatpush1.xpose.msra.mxu0 %v891
        %923 = vmatprep.subr.mxu0 0.0
        %924 = vmatpush1.xpose.msra.mxu0 %v889
        %925 = vmatprep.subr.mxu0 0.0
        %926 = vmatpush2.xpose.msra.mxu0 0.0
        %927 = vmatprep.subr.mxu0 0.0
        %928 = vmatpush2.xpose.msra.mxu0 0.0
        %929 = vmatprep.subr.mxu0 0.0
        %930 = vmatpush2.xpose.msra.mxu0 0.0
        %931 = vmatprep.subr.mxu0 0.0
        %932 = vmatpush2.xpose.msra.mxu0 0.0
        %933 = vmatprep.subr.mxu0 0.0
        %934 = vmatpush2.xpose.msra.mxu0 0.0
        %935 = vmatprep.subr.mxu0 0.0
        %936 = vmatpush2.xpose.msra.mxu0 0.0
        %937 = vmatprep.subr.mxu0 0.0
        %938 = vmatpush2.xpose.msra.mxu0 0.0
        %939 = vmatprep.subr.mxu0 0.0
        %940 = vmatpush2.xpose.msra.mxu0 0.0
        %941 = vmatprep.subr.mxu0 0.0
        %942 = vmatpush2.xpose.msra.mxu0 0.0
        %943 = vmatprep.subr.mxu0 0.0
        %944 = vmatpush2.xpose.msra.mxu0 0.0
        %945 = vmatprep.subr.mxu0 0.0
        %946 = vmatpush2.xpose.msra.mxu0 0.0
        %947 = vmatprep.subr.mxu0 0.0
        %948 = vmatpush2.xpose.msra.mxu0 0.0
        %949 = vmatprep.subr.mxu0 0.0
        %950 = vmatpush2.xpose.msra.mxu0 0.0
        %951 = vmatprep.subr.mxu0 0.0
        %952 = vmatpush2.xpose.msra.mxu0 0.0
        %953 = vmatprep.subr.mxu0 0.0
        %954 = vmatpush2.xpose.msra.mxu0 0.0
        %955 = vmatprep.subr.mxu0 0.0
        %956 = vmatpush2.xpose.msra.mxu0 0.0
        %957 = vmatprep.mubr.f32.mxu0 0.0
        %958 = vmatmul.mubr.f32.gmra.mxu0 %v885
        %v959 = vpop.f32.mrf.mxu0
        %v960 = vadd.f32 0.0, %v959
        %v961 = vpop.f32.mrf.mxu0
        %962 = vmatprep.mubr.f32.mxu0 0.0
        %963 = vmatmul.mubr.f32.gmra.mxu0 %v887
        %v964 = vpop.f32.mrf.mxu0
        %v965 = vadd.f32 0.0, %v964
        %v966 = vpop.f32.mrf.mxu0
        %967 = vdwg.mxu0
        %v968 = vsel %vm773, %v960, -inf
        %969 = vmax.xlane.f32.xlu0 %v968
        %v970 = vpop.xlane.xlu0 %969
        %v971 = vsel %vm773, %v965, -inf
        %972 = vmax.xlane.f32.xlu0 %v971
        %v973 = vpop.xlane.xlu0 %972
        %v974 = vsub.f32 %v960, %v970
        %v975 = vsub.f32 %v965, %v973
        %v976 = vmul.f32 %v974, 1.442695
        %v977 = vpow.pop %v976
        %v978 = vmul.f32 %v975, 1.442695
        %v979 = vpow.pop %v978
        %v980 = vsel %vm773, %v977, 0.0
        %981 = vadd.xlane.f32.xlu0 %v980
        %v982 = vpop.xlane.xlu0 %981
        %v983 = vsel %vm773, %v979, 0.0
        %984 = vadd.xlane.f32.xlu0 %v983
        %v985 = vpop.xlane.xlu0 %984
        %v986 = vrcp.pop %v982
        %v987 = vrcp.pop %v985
        %v988 = vmul.f32 %v977, %v986
        %v989 = vmul.f32 %v979, %v987
        %992 = vrot.lane.b32.xlu0 %v677, 96
        %v993 = vpop.permute.xlu0 %992
        %994 = vrot.lane.b32.xlu0 %v682, 96
        %v995 = vpop.permute.xlu0 %994
        %v999 = vsel %vm773, %v988, 0
        %v1002 = vsel %vm773, %v989, 0
        %1004 = vmatprep.subr.mxu0 0.0
        %1005 = vmatpush1.msra.mxu0 0.0
        %1006 = vmatprep.subr.mxu0 0.0
        %1007 = vmatpush1.msra.mxu0 0.0
        %1008 = vmatprep.subr.mxu0 0.0
        %1009 = vmatpush1.msra.mxu0 0.0
        %1010 = vmatprep.subr.mxu0 0.0
        %1011 = vmatpush1.msra.mxu0 0.0
        %1012 = vmatprep.subr.mxu0 0.0
        %1013 = vmatpush1.msra.mxu0 0.0
        %1014 = vmatprep.subr.mxu0 0.0
        %1015 = vmatpush1.msra.mxu0 0.0
        %1016 = vmatprep.subr.mxu0 0.0
        %1017 = vmatpush1.msra.mxu0 0.0
        %1018 = vmatprep.subr.mxu0 0.0
        %1019 = vmatpush1.msra.mxu0 0.0
        %1020 = vmatprep.subr.mxu0 0.0
        %1021 = vmatpush1.msra.mxu0 0.0
        %1022 = vmatprep.subr.mxu0 0.0
        %1023 = vmatpush1.msra.mxu0 0.0
        %1024 = vmatprep.subr.mxu0 0.0
        %1025 = vmatpush1.msra.mxu0 0.0
        %1026 = vmatprep.subr.mxu0 0.0
        %1027 = vmatpush1.msra.mxu0 0.0
        %1028 = vmatprep.subr.mxu0 0.0
        %1029 = vmatpush1.msra.mxu0 0.0
        %1030 = vmatprep.subr.mxu0 0.0
        %1031 = vmatpush1.msra.mxu0 0.0
        %1032 = vmatprep.subr.mxu0 0.0
        %1033 = vmatpush1.msra.mxu0 %v995
        %1034 = vmatprep.subr.mxu0 0.0
        %1035 = vmatpush1.msra.mxu0 %v993
        %1036 = vmatprep.subr.mxu0 0.0
        %1037 = vmatpush2.msra.mxu0 0.0
        %1038 = vmatprep.subr.mxu0 0.0
        %1039 = vmatpush2.msra.mxu0 0.0
        %1040 = vmatprep.subr.mxu0 0.0
        %1041 = vmatpush2.msra.mxu0 0.0
        %1042 = vmatprep.subr.mxu0 0.0
        %1043 = vmatpush2.msra.mxu0 0.0
        %1044 = vmatprep.subr.mxu0 0.0
        %1045 = vmatpush2.msra.mxu0 0.0
        %1046 = vmatprep.subr.mxu0 0.0
        %1047 = vmatpush2.msra.mxu0 0.0
        %1048 = vmatprep.subr.mxu0 0.0
        %1049 = vmatpush2.msra.mxu0 0.0
        %1050 = vmatprep.subr.mxu0 0.0
        %1051 = vmatpush2.msra.mxu0 0.0
        %1052 = vmatprep.subr.mxu0 0.0
        %1053 = vmatpush2.msra.mxu0 0.0
        %1054 = vmatprep.subr.mxu0 0.0
        %1055 = vmatpush2.msra.mxu0 0.0
        %1056 = vmatprep.subr.mxu0 0.0
        %1057 = vmatpush2.msra.mxu0 0.0
        %1058 = vmatprep.subr.mxu0 0.0
        %1059 = vmatpush2.msra.mxu0 0.0
        %1060 = vmatprep.subr.mxu0 0.0
        %1061 = vmatpush2.msra.mxu0 0.0
        %1062 = vmatprep.subr.mxu0 0.0
        %1063 = vmatpush2.msra.mxu0 0.0
        %1064 = vmatprep.subr.mxu0 0.0
        %1065 = vmatpush2.msra.mxu0 0.0
        %1066 = vmatprep.subr.mxu0 0.0
        %1067 = vmatpush2.msra.mxu0 0.0
        %1068 = vmatprep.mubr.f32.mxu0 0.0
        %1069 = vmatmul.mubr.f32.gmra.mxu0 %v999
        %v1070 = vpop.f32.mrf.mxu0
        %v1071 = vadd.f32 0.0, %v1070
        %v1072 = vpop.f32.mrf.mxu0
        %1073 = vmatprep.mubr.f32.mxu0 0.0
        %1074 = vmatmul.mubr.f32.gmra.mxu0 %v1002
        %v1075 = vpop.f32.mrf.mxu0
        %v1076 = vadd.f32 0.0, %v1075
        %v1077 = vpop.f32.mrf.mxu0
        %1078 = vdwg.mxu0
        %1079 = vrot.lane.b32.xlu0 %v499, 64
        %v1080 = vpop.permute.xlu0 %1079
        %1081 = vrot.lane.b32.xlu0 %v504, 64
        %v1082 = vpop.permute.xlu0 %1081
        %1083 = vrot.lane.b32.xlu0 %v588, 64
        %v1084 = vpop.permute.xlu0 %1083
        %1085 = vrot.lane.b32.xlu0 %v593, 64
        %v1086 = vpop.permute.xlu0 %1085
        %v1087 = vsel %vm685, %v1080, 0
        %v1089 = vsel %vm685, %v1082, 0
        %v1091 = vsel %vm685, %v1084, 0
        %v1093 = vsel %vm685, %v1086, 0
        %1095 = vmatprep.subr.mxu0 0.0
        %1096 = vmatpush1.xpose.msra.mxu0 0.0
        %1097 = vmatprep.subr.mxu0 0.0
        %1098 = vmatpush1.xpose.msra.mxu0 0.0
        %1099 = vmatprep.subr.mxu0 0.0
        %1100 = vmatpush1.xpose.msra.mxu0 0.0
        %1101 = vmatprep.subr.mxu0 0.0
        %1102 = vmatpush1.xpose.msra.mxu0 0.0
        %1103 = vmatprep.subr.mxu0 0.0
        %1104 = vmatpush1.xpose.msra.mxu0 0.0
        %1105 = vmatprep.subr.mxu0 0.0
        %1106 = vmatpush1.xpose.msra.mxu0 0.0
        %1107 = vmatprep.subr.mxu0 0.0
        %1108 = vmatpush1.xpose.msra.mxu0 0.0
        %1109 = vmatprep.subr.mxu0 0.0
        %1110 = vmatpush1.xpose.msra.mxu0 0.0
        %1111 = vmatprep.subr.mxu0 0.0
        %1112 = vmatpush1.xpose.msra.mxu0 0.0
        %1113 = vmatprep.subr.mxu0 0.0
        %1114 = vmatpush1.xpose.msra.mxu0 0.0
        %1115 = vmatprep.subr.mxu0 0.0
        %1116 = vmatpush1.xpose.msra.mxu0 0.0
        %1117 = vmatprep.subr.mxu0 0.0
        %1118 = vmatpush1.xpose.msra.mxu0 0.0
        %1119 = vmatprep.subr.mxu0 0.0
        %1120 = vmatpush1.xpose.msra.mxu0 0.0
        %1121 = vmatprep.subr.mxu0 0.0
        %1122 = vmatpush1.xpose.msra.mxu0 0.0
        %1123 = vmatprep.subr.mxu0 0.0
        %1124 = vmatpush1.xpose.msra.mxu0 %v1093
        %1125 = vmatprep.subr.mxu0 0.0
        %1126 = vmatpush1.xpose.msra.mxu0 %v1091
        %1127 = vmatprep.subr.mxu0 0.0
        %1128 = vmatpush2.xpose.msra.mxu0 0.0
        %1129 = vmatprep.subr.mxu0 0.0
        %1130 = vmatpush2.xpose.msra.mxu0 0.0
        %1131 = vmatprep.subr.mxu0 0.0
        %1132 = vmatpush2.xpose.msra.mxu0 0.0
        %1133 = vmatprep.subr.mxu0 0.0
        %1134 = vmatpush2.xpose.msra.mxu0 0.0
        %1135 = vmatprep.subr.mxu0 0.0
        %1136 = vmatpush2.xpose.msra.mxu0 0.0
        %1137 = vmatprep.subr.mxu0 0.0
        %1138 = vmatpush2.xpose.msra.mxu0 0.0
        %1139 = vmatprep.subr.mxu0 0.0
        %1140 = vmatpush2.xpose.msra.mxu0 0.0
        %1141 = vmatprep.subr.mxu0 0.0
        %1142 = vmatpush2.xpose.msra.mxu0 0.0
        %1143 = vmatprep.subr.mxu0 0.0
        %1144 = vmatpush2.xpose.msra.mxu0 0.0
        %1145 = vmatprep.subr.mxu0 0.0
        %1146 = vmatpush2.xpose.msra.mxu0 0.0
        %1147 = vmatprep.subr.mxu0 0.0
        %1148 = vmatpush2.xpose.msra.mxu0 0.0
        %1149 = vmatprep.subr.mxu0 0.0
        %1150 = vmatpush2.xpose.msra.mxu0 0.0
        %1151 = vmatprep.subr.mxu0 0.0
        %1152 = vmatpush2.xpose.msra.mxu0 0.0
        %1153 = vmatprep.subr.mxu0 0.0
        %1154 = vmatpush2.xpose.msra.mxu0 0.0
        %1155 = vmatprep.subr.mxu0 0.0
        %1156 = vmatpush2.xpose.msra.mxu0 0.0
        %1157 = vmatprep.subr.mxu0 0.0
        %1158 = vmatpush2.xpose.msra.mxu0 0.0
        %1159 = vmatprep.mubr.f32.mxu0 0.0
        %1160 = vmatmul.mubr.f32.gmra.mxu0 %v1087
        %v1161 = vpop.f32.mrf.mxu0
        %v1162 = vadd.f32 0.0, %v1161
        %v1163 = vpop.f32.mrf.mxu0
        %1164 = vmatprep.mubr.f32.mxu0 0.0
        %1165 = vmatmul.mubr.f32.gmra.mxu0 %v1089
        %v1166 = vpop.f32.mrf.mxu0
        %v1167 = vadd.f32 0.0, %v1166
        %v1168 = vpop.f32.mrf.mxu0
        %1169 = vdwg.mxu0
        %v1170 = vsel %vm773, %v1162, -inf
        %1171 = vmax.xlane.f32.xlu0 %v1170
        %v1172 = vpop.xlane.xlu0 %1171
        %v1173 = vsel %vm773, %v1167, -inf
        %1174 = vmax.xlane.f32.xlu0 %v1173
        %v1175 = vpop.xlane.xlu0 %1174
        %v1176 = vsub.f32 %v1162, %v1172
        %v1177 = vsub.f32 %v1167, %v1175
        %v1178 = vmul.f32 %v1176, 1.442695
        %v1179 = vpow.pop %v1178
        %v1180 = vmul.f32 %v1177, 1.442695
        %v1181 = vpow.pop %v1180
        %v1182 = vsel %vm773, %v1179, 0.0
        %1183 = vadd.xlane.f32.xlu0 %v1182
        %v1184 = vpop.xlane.xlu0 %1183
        %v1185 = vsel %vm773, %v1181, 0.0
        %1186 = vadd.xlane.f32.xlu0 %v1185
        %v1187 = vpop.xlane.xlu0 %1186
        %v1188 = vrcp.pop %v1184
        %v1189 = vrcp.pop %v1187
        %v1190 = vmul.f32 %v1179, %v1188
        %v1191 = vmul.f32 %v1181, %v1189
        %1192 = vrot.lane.b32.xlu0 %v677, 64
        %v1193 = vpop.permute.xlu0 %1192
        %1194 = vrot.lane.b32.xlu0 %v682, 64
        %v1195 = vpop.permute.xlu0 %1194
        %v1199 = vsel %vm773, %v1190, 0
        %v1202 = vsel %vm773, %v1191, 0
        %1204 = vmatprep.subr.mxu0 0.0
        %1205 = vmatpush1.msra.mxu0 0.0
        %1206 = vmatprep.subr.mxu0 0.0
        %1207 = vmatpush1.msra.mxu0 0.0
        %1208 = vmatprep.subr.mxu0 0.0
        %1209 = vmatpush1.msra.mxu0 0.0
        %1210 = vmatprep.subr.mxu0 0.0
        %1211 = vmatpush1.msra.mxu0 0.0
        %1212 = vmatprep.subr.mxu0 0.0
        %1213 = vmatpush1.msra.mxu0 0.0
        %1214 = vmatprep.subr.mxu0 0.0
        %1215 = vmatpush1.msra.mxu0 0.0
        %1216 = vmatprep.subr.mxu0 0.0
        %1217 = vmatpush1.msra.mxu0 0.0
        %1218 = vmatprep.subr.mxu0 0.0
        %1219 = vmatpush1.msra.mxu0 0.0
        %1220 = vmatprep.subr.mxu0 0.0
        %1221 = vmatpush1.msra.mxu0 0.0
        %1222 = vmatprep.subr.mxu0 0.0
        %1223 = vmatpush1.msra.mxu0 0.0
        %1224 = vmatprep.subr.mxu0 0.0
        %1225 = vmatpush1.msra.mxu0 0.0
        %1226 = vmatprep.subr.mxu0 0.0
        %1227 = vmatpush1.msra.mxu0 0.0
        %1228 = vmatprep.subr.mxu0 0.0
        %1229 = vmatpush1.msra.mxu0 0.0
        %1230 = vmatprep.subr.mxu0 0.0
        %1231 = vmatpush1.msra.mxu0 0.0
        %1232 = vmatprep.subr.mxu0 0.0
        %1233 = vmatpush1.msra.mxu0 %v1195
        %1234 = vmatprep.subr.mxu0 0.0
        %1235 = vmatpush1.msra.mxu0 %v1193
        %1236 = vmatprep.subr.mxu0 0.0
        %1237 = vmatpush2.msra.mxu0 0.0
        %1238 = vmatprep.subr.mxu0 0.0
        %1239 = vmatpush2.msra.mxu0 0.0
        %1240 = vmatprep.subr.mxu0 0.0
        %1241 = vmatpush2.msra.mxu0 0.0
        %1242 = vmatprep.subr.mxu0 0.0
        %1243 = vmatpush2.msra.mxu0 0.0
        %1244 = vmatprep.subr.mxu0 0.0
        %1245 = vmatpush2.msra.mxu0 0.0
        %1246 = vmatprep.subr.mxu0 0.0
        %1247 = vmatpush2.msra.mxu0 0.0
        %1248 = vmatprep.subr.mxu0 0.0
        %1249 = vmatpush2.msra.mxu0 0.0
        %1250 = vmatprep.subr.mxu0 0.0
        %1251 = vmatpush2.msra.mxu0 0.0
        %1252 = vmatprep.subr.mxu0 0.0
        %1253 = vmatpush2.msra.mxu0 0.0
        %1254 = vmatprep.subr.mxu0 0.0
        %1255 = vmatpush2.msra.mxu0 0.0
        %1256 = vmatprep.subr.mxu0 0.0
        %1257 = vmatpush2.msra.mxu0 0.0
        %1258 = vmatprep.subr.mxu0 0.0
        %1259 = vmatpush2.msra.mxu0 0.0
        %1260 = vmatprep.subr.mxu0 0.0
        %1261 = vmatpush2.msra.mxu0 0.0
        %1262 = vmatprep.subr.mxu0 0.0
        %1263 = vmatpush2.msra.mxu0 0.0
        %1264 = vmatprep.subr.mxu0 0.0
        %1265 = vmatpush2.msra.mxu0 0.0
        %1266 = vmatprep.subr.mxu0 0.0
        %1267 = vmatpush2.msra.mxu0 0.0
        %1268 = vmatprep.mubr.f32.mxu0 0.0
        %1269 = vmatmul.mubr.f32.gmra.mxu0 %v1199
        %v1270 = vpop.f32.mrf.mxu0
        %v1271 = vadd.f32 0.0, %v1270
        %v1272 = vpop.f32.mrf.mxu0
        %1273 = vmatprep.mubr.f32.mxu0 0.0
        %1274 = vmatmul.mubr.f32.gmra.mxu0 %v1202
        %v1275 = vpop.f32.mrf.mxu0
        %v1276 = vadd.f32 0.0, %v1275
        %v1277 = vpop.f32.mrf.mxu0
        %1278 = vdwg.mxu0
        %1279 = vrot.lane.b32.xlu0 %v499, 32
        %v1280 = vpop.permute.xlu0 %1279
        %1281 = vrot.lane.b32.xlu0 %v504, 32
        %v1282 = vpop.permute.xlu0 %1281
        %1283 = vrot.lane.b32.xlu0 %v588, 32
        %v1284 = vpop.permute.xlu0 %1283
        %1285 = vrot.lane.b32.xlu0 %v593, 32
        %v1286 = vpop.permute.xlu0 %1285
        %v1287 = vsel %vm685, %v1280, 0
        %v1289 = vsel %vm685, %v1282, 0
        %v1291 = vsel %vm685, %v1284, 0
        %v1293 = vsel %vm685, %v1286, 0
        %1295 = vmatprep.subr.mxu0 0.0
        %1296 = vmatpush1.xpose.msra.mxu0 0.0
        %1297 = vmatprep.subr.mxu0 0.0
        %1298 = vmatpush1.xpose.msra.mxu0 0.0
        %1299 = vmatprep.subr.mxu0 0.0
        %1300 = vmatpush1.xpose.msra.mxu0 0.0
        %1301 = vmatprep.subr.mxu0 0.0
        %1302 = vmatpush1.xpose.msra.mxu0 0.0
        %1303 = vmatprep.subr.mxu0 0.0
        %1304 = vmatpush1.xpose.msra.mxu0 0.0
        %1305 = vmatprep.subr.mxu0 0.0
        %1306 = vmatpush1.xpose.msra.mxu0 0.0
        %1307 = vmatprep.subr.mxu0 0.0
        %1308 = vmatpush1.xpose.msra.mxu0 0.0
        %1309 = vmatprep.subr.mxu0 0.0
        %1310 = vmatpush1.xpose.msra.mxu0 0.0
        %1311 = vmatprep.subr.mxu0 0.0
        %1312 = vmatpush1.xpose.msra.mxu0 0.0
        %1313 = vmatprep.subr.mxu0 0.0
        %1314 = vmatpush1.xpose.msra.mxu0 0.0
        %1315 = vmatprep.subr.mxu0 0.0
        %1316 = vmatpush1.xpose.msra.mxu0 0.0
        %1317 = vmatprep.subr.mxu0 0.0
        %1318 = vmatpush1.xpose.msra.mxu0 0.0
        %1319 = vmatprep.subr.mxu0 0.0
        %1320 = vmatpush1.xpose.msra.mxu0 0.0
        %1321 = vmatprep.subr.mxu0 0.0
        %1322 = vmatpush1.xpose.msra.mxu0 0.0
        %1323 = vmatprep.subr.mxu0 0.0
        %1324 = vmatpush1.xpose.msra.mxu0 %v1293
        %1325 = vmatprep.subr.mxu0 0.0
        %1326 = vmatpush1.xpose.msra.mxu0 %v1291
        %1327 = vmatprep.subr.mxu0 0.0
        %1328 = vmatpush2.xpose.msra.mxu0 0.0
        %1329 = vmatprep.subr.mxu0 0.0
        %1330 = vmatpush2.xpose.msra.mxu0 0.0
        %1331 = vmatprep.subr.mxu0 0.0
        %1332 = vmatpush2.xpose.msra.mxu0 0.0
        %1333 = vmatprep.subr.mxu0 0.0
        %1334 = vmatpush2.xpose.msra.mxu0 0.0
        %1335 = vmatprep.subr.mxu0 0.0
        %1336 = vmatpush2.xpose.msra.mxu0 0.0
        %1337 = vmatprep.subr.mxu0 0.0
        %1338 = vmatpush2.xpose.msra.mxu0 0.0
        %1339 = vmatprep.subr.mxu0 0.0
        %1340 = vmatpush2.xpose.msra.mxu0 0.0
        %1341 = vmatprep.subr.mxu0 0.0
        %1342 = vmatpush2.xpose.msra.mxu0 0.0
        %1343 = vmatprep.subr.mxu0 0.0
        %1344 = vmatpush2.xpose.msra.mxu0 0.0
        %1345 = vmatprep.subr.mxu0 0.0
        %1346 = vmatpush2.xpose.msra.mxu0 0.0
        %1347 = vmatprep.subr.mxu0 0.0
        %1348 = vmatpush2.xpose.msra.mxu0 0.0
        %1349 = vmatprep.subr.mxu0 0.0
        %1350 = vmatpush2.xpose.msra.mxu0 0.0
        %1351 = vmatprep.subr.mxu0 0.0
        %1352 = vmatpush2.xpose.msra.mxu0 0.0
        %1353 = vmatprep.subr.mxu0 0.0
        %1354 = vmatpush2.xpose.msra.mxu0 0.0
        %1355 = vmatprep.subr.mxu0 0.0
        %1356 = vmatpush2.xpose.msra.mxu0 0.0
        %1357 = vmatprep.subr.mxu0 0.0
        %1358 = vmatpush2.xpose.msra.mxu0 0.0
        %1359 = vmatprep.mubr.f32.mxu0 0.0
        %1360 = vmatmul.mubr.f32.gmra.mxu0 %v1287
        %v1361 = vpop.f32.mrf.mxu0
        %v1362 = vadd.f32 0.0, %v1361
        %v1363 = vpop.f32.mrf.mxu0
        %1364 = vmatprep.mubr.f32.mxu0 0.0
        %1365 = vmatmul.mubr.f32.gmra.mxu0 %v1289
        %v1366 = vpop.f32.mrf.mxu0
        %v1367 = vadd.f32 0.0, %v1366
        %v1368 = vpop.f32.mrf.mxu0
        %1369 = vdwg.mxu0
        %v1370 = vsel %vm773, %v1362, -inf
        %1371 = vmax.xlane.f32.xlu0 %v1370
        %v1372 = vpop.xlane.xlu0 %1371
        %v1373 = vsel %vm773, %v1367, -inf
        %1374 = vmax.xlane.f32.xlu0 %v1373
        %v1375 = vpop.xlane.xlu0 %1374
        %v1376 = vsub.f32 %v1362, %v1372
        %v1377 = vsub.f32 %v1367, %v1375
        %v1378 = vmul.f32 %v1376, 1.442695
        %v1379 = vpow.pop %v1378
        %v1380 = vmul.f32 %v1377, 1.442695
        %v1381 = vpow.pop %v1380
        %v1382 = vsel %vm773, %v1379, 0.0
        %1383 = vadd.xlane.f32.xlu0 %v1382
        %v1384 = vpop.xlane.xlu0 %1383
        %v1385 = vsel %vm773, %v1381, 0.0
        %1386 = vadd.xlane.f32.xlu0 %v1385
        %v1387 = vpop.xlane.xlu0 %1386
        %v1388 = vrcp.pop %v1384
        %v1389 = vrcp.pop %v1387
        %v1390 = vmul.f32 %v1379, %v1388
        %v1391 = vmul.f32 %v1381, %v1389
        %1392 = vrot.lane.b32.xlu0 %v677, 32
        %v1393 = vpop.permute.xlu0 %1392
        %1394 = vrot.lane.b32.xlu0 %v682, 32
        %v1395 = vpop.permute.xlu0 %1394
        %v1399 = vsel %vm773, %v1390, 0
        %v1402 = vsel %vm773, %v1391, 0
        %1404 = vmatprep.subr.mxu0 0.0
        %1405 = vmatpush1.msra.mxu0 0.0
        %1406 = vmatprep.subr.mxu0 0.0
        %1407 = vmatpush1.msra.mxu0 0.0
        %1408 = vmatprep.subr.mxu0 0.0
        %1409 = vmatpush1.msra.mxu0 0.0
        %1410 = vmatprep.subr.mxu0 0.0
        %1411 = vmatpush1.msra.mxu0 0.0
        %1412 = vmatprep.subr.mxu0 0.0
        %1413 = vmatpush1.msra.mxu0 0.0
        %1414 = vmatprep.subr.mxu0 0.0
        %1415 = vmatpush1.msra.mxu0 0.0
        %1416 = vmatprep.subr.mxu0 0.0
        %1417 = vmatpush1.msra.mxu0 0.0
        %1418 = vmatprep.subr.mxu0 0.0
        %1419 = vmatpush1.msra.mxu0 0.0
        %1420 = vmatprep.subr.mxu0 0.0
        %1421 = vmatpush1.msra.mxu0 0.0
        %1422 = vmatprep.subr.mxu0 0.0
        %1423 = vmatpush1.msra.mxu0 0.0
        %1424 = vmatprep.subr.mxu0 0.0
        %1425 = vmatpush1.msra.mxu0 0.0
        %1426 = vmatprep.subr.mxu0 0.0
        %1427 = vmatpush1.msra.mxu0 0.0
        %1428 = vmatprep.subr.mxu0 0.0
        %1429 = vmatpush1.msra.mxu0 0.0
        %1430 = vmatprep.subr.mxu0 0.0
        %1431 = vmatpush1.msra.mxu0 0.0
        %1432 = vmatprep.subr.mxu0 0.0
        %1433 = vmatpush1.msra.mxu0 %v1395
        %1434 = vmatprep.subr.mxu0 0.0
        %1435 = vmatpush1.msra.mxu0 %v1393
        %1436 = vmatprep.subr.mxu0 0.0
        %1437 = vmatpush2.msra.mxu0 0.0
        %1438 = vmatprep.subr.mxu0 0.0
        %1439 = vmatpush2.msra.mxu0 0.0
        %1440 = vmatprep.subr.mxu0 0.0
        %1441 = vmatpush2.msra.mxu0 0.0
        %1442 = vmatprep.subr.mxu0 0.0
        %1443 = vmatpush2.msra.mxu0 0.0
        %1444 = vmatprep.subr.mxu0 0.0
        %1445 = vmatpush2.msra.mxu0 0.0
        %1446 = vmatprep.subr.mxu0 0.0
        %1447 = vmatpush2.msra.mxu0 0.0
        %1448 = vmatprep.subr.mxu0 0.0
        %1449 = vmatpush2.msra.mxu0 0.0
        %1450 = vmatprep.subr.mxu0 0.0
        %1451 = vmatpush2.msra.mxu0 0.0
        %1452 = vmatprep.subr.mxu0 0.0
        %1453 = vmatpush2.msra.mxu0 0.0
        %1454 = vmatprep.subr.mxu0 0.0
        %1455 = vmatpush2.msra.mxu0 0.0
        %1456 = vmatprep.subr.mxu0 0.0
        %1457 = vmatpush2.msra.mxu0 0.0
        %1458 = vmatprep.subr.mxu0 0.0
        %1459 = vmatpush2.msra.mxu0 0.0
        %1460 = vmatprep.subr.mxu0 0.0
        %1461 = vmatpush2.msra.mxu0 0.0
        %1462 = vmatprep.subr.mxu0 0.0
        %1463 = vmatpush2.msra.mxu0 0.0
        %1464 = vmatprep.subr.mxu0 0.0
        %1465 = vmatpush2.msra.mxu0 0.0
        %1466 = vmatprep.subr.mxu0 0.0
        %1467 = vmatpush2.msra.mxu0 0.0
        %1468 = vmatprep.mubr.f32.mxu0 0.0
        %1469 = vmatmul.mubr.f32.gmra.mxu0 %v1399
        %v1470 = vpop.f32.mrf.mxu0
        %v1471 = vadd.f32 0.0, %v1470
        %v1472 = vpop.f32.mrf.mxu0
        %1473 = vmatprep.mubr.f32.mxu0 0.0
        %1474 = vmatmul.mubr.f32.gmra.mxu0 %v1402
        %v1475 = vpop.f32.mrf.mxu0
        %v1476 = vadd.f32 0.0, %v1475
        %v1477 = vpop.f32.mrf.mxu0
        %1478 = vdwg.mxu0
        %1481 = vrot.lane.b32.xlu0 %v1071, 32
        %v1482 = vpop.permute.xlu0 %1481
        %1483 = vrot.lane.b32.xlu0 %v1076, 32
        %v1484 = vpop.permute.xlu0 %1483
        %1489 = vrot.lane.b32.xlu0 %v1271, 64
        %v1490 = vpop.permute.xlu0 %1489
        %1491 = vrot.lane.b32.xlu0 %v1276, 64
        %v1492 = vpop.permute.xlu0 %1491
        %1497 = vrot.lane.b32.xlu0 %v1471, 96
        %v1498 = vpop.permute.xlu0 %1497
        %1499 = vrot.lane.b32.xlu0 %v1476, 96
        %v1500 = vpop.permute.xlu0 %1499
        %v1503 = vsel %vm685, %v869, %v1482
        %v1504 = vsel %vm685, %v874, %v1484
        %v1505 = vsel %vm425, %v1503, %v1490
        %v1506 = vsel %vm425, %v1504, %v1492
        %vm1507 = vcmask 785408
        %v1508 = vsel %vm1507, %v1505, %v1498
        %v1509 = vsel %vm1507, %v1506, %v1500
        %1510 = vst [vmem:[%s408] sm:$0xff] %v1508
        %1511 = vst [vmem:[%s408 + $0x8] sm:$0xff] %v1509
        %s1512 = sand.u32 %s193, 1
        %s1513 = scalar_lea.sflag [#allocation4], %s1512
        %s1514 = sand.u32 %s193, 1
        %s1515 = smul.addr %s1514, 16
        %s1516 = scalar_lea.vmem [#allocation13], %s1515
        // Predicated region
        $region69: #{tpu_custom_call.1} parent=43 // pred_check
          %p1517 = pneg %p203
        $region70: #{tpu_custom_call.1} parent=43 // pred_check_branch
          %1519 = sbr.rel (%p1517) target = $region72
        $region71: #{tpu_custom_call.1} parent=43 // pred_region
          %s1520 = smul.u32 2, %s33
          %s1522 = ssub.s32 256, 256
          %1523 = vsyncadd %s1513, %s1522
          %s1524 = smul.addr %s32, 2
          %s1525 = sadd.s32 %s1520, %s1524
          %s1526 = smul.addr %s1525, 128
          %s1527 = scalar_lea.hbm %s6, %s1526
          %s1528 = sshll.u32 %s1516, 4
          %s1529 = int_to_ptr.vmem [resolvable:$true] %s1528
          %1534 = dma.vmem_to_hbm [thread:$0]  %s1529, 256, %s1527, %s1513, 128, 128, 8
        $region72: #{tpu_custom_call.1} parent=43 // pred_fallthru
          _
      $region44: #{tpu_custom_call.1} parent=5 // pred_fallthru
        _
      %p1535 = scmp.le.s32.totalorder 2, %s23
      // Predicated region
      $region73: #{tpu_custom_call.1} parent=5 // pred_check
        %p1536 = pneg %p1535
      $region74: #{tpu_custom_call.1} parent=5 // pred_check_branch
        %1538 = sbr.rel (%p1536) target = $region76
      $region75: #{tpu_custom_call.1} parent=5 // pred_region
        %s1539 = ssub.s32 %s23, 2
        // Predicated region
        $region77: #{tpu_custom_call.1} parent=75 // pred_check
          %p1540 = pneg %p209
        $region78: #{tpu_custom_call.1} parent=75 // pred_check_branch
          %1542 = sbr.rel (%p1540) target = $region80
        $region79: #{tpu_custom_call.1} parent=75 // pred_region
          %s1543 = sand.u32 %s194, 1
          %s1544 = scalar_lea.sflag [#allocation4], %s1543
          %s1545 = sand.u32 %s194, 1
          %s1546 = smul.addr %s1545, 16
          %s1547 = scalar_lea.vmem [#allocation13], %s1546
          %1548 = dma.done %s1544, 256
        $region80: #{tpu_custom_call.1} parent=75 // pred_fallthru
          _
      $region76: #{tpu_custom_call.1} parent=5 // pred_fallthru
        _
    $region6: #{tpu_custom_call.1} parent=1 // loop_footer
      %s27 = sadd.s32 1, %s23
    $region7: #{tpu_custom_call.1} parent=1 // loop_footer_branch
      %22 = sbr.rel target = $region3
    $region8: #{tpu_custom_call.1} parent=1 // loop_exit
      _
    %1549 = vsyncpa [#allocation3], 1
    %s1550 = scalar_lea.sflag [#allocation3], 1
    %1551 = vsyncpa %s1550, 1
    %1552 = vsyncpa [#allocation6], 1
    %s1553 = scalar_lea.sflag [#allocation6], 1
    %1554 = vsyncpa %s1553, 1
    %1555 = vsyncpa [#allocation9], 1
    %1556 = vsyncpa [#allocation12], 1
    %1557 = vsyncpa [#allocation4], 1
    %s1558 = scalar_lea.sflag [#allocation4], 1
    %1559 = vsyncpa %s1558, 1

</llo_original>
